<compile_context>
chip_gen: v7x
topology: tpu7x:2x2x1
jax: 0.10.0
libtpu: 0.0.40
codegen_flags: <defaults>
</compile_context>

<pallas_src>
import numpy as np
import jax
import jax.numpy as jnp
from jax.experimental import pallas as pl
from jax.experimental.pallas import tpu as pltpu

# ----------------------------- constants ------------------------------------
NUM_RBF = 16
NUM_POS = 16                       # num_positional_embeddings
MAX_REL = 32                       # max_relative_feature
NUM_CLASSES = 2 * MAX_REL + 2      # 66
EDGE_IN = NUM_POS + 25 * NUM_RBF   # 416
LN_EPS = 1e-5                      # torch LayerNorm default
D_MIN, D_MAX = 2.0, 22.0
SIGMA = (D_MAX - D_MIN) / NUM_RBF  # 1.25

PK_W = 32                          # packed per-edge record width (f32 view)
PAIR_W = 128                       # pair-distance band width (25 lanes used)
ACT_W = 512                        # activation width: 66 one-hot + 400 RBF + pad
RBF_OFF = NUM_CLASSES              # 66

# atom indices inside the packed 5-atom layout
_N, _CA, _C, _O, _CB = 0, 1, 2, 3, 4
# (center_atom, neighbor_atom) for RBF pairs 1..24 in the exact PyTorch order
# (pair 0 is Ca-Ca via the masked/top-k distance).
PAIRS = [
    (_N, _N), (_C, _C), (_O, _O), (_CB, _CB),
    (_CA, _N), (_CA, _C), (_CA, _O), (_CA, _CB),
    (_N, _C), (_N, _O), (_N, _CB),
    (_CB, _C), (_CB, _O), (_O, _C),
    (_N, _CA), (_C, _CA), (_O, _CA), (_CB, _CA),
    (_C, _N), (_O, _N), (_CB, _N),
    (_C, _CB), (_O, _CB), (_C, _O),
]
REF_PAIRS = [(_CA, _CA)] + PAIRS   # 25 pairs, reference ordering


# ------------------------------- kernel -------------------------------------
def _edge_feature_kernel(p_ref, s_ref, bc_ref, lane_ref, w_ref, b_ref,
                         g_ref, bb_ref, out_ref):
    p64 = p_ref[...]                                   # [tm, 64] bf16 (hi|lo limbs)
    lane_f = lane_ref[0:1, :]                          # [1, ACT_W] lane index
    mu = lane_ref[1:2, :]                              # [1, ACT_W] RBF centers
    band_m = lane_ref[2:3, :]                          # [1, ACT_W] 1.0 on RBF lanes
    eps = lane_ref[3:4, 0:PAIR_W]                      # [1, PAIR_W] per-pair eps

    # One MXU pass builds dx|dy|dz for all 25 atom pairs (plus the positional
    # class code routed to lane PAIR_W-1 of dx). hi/lo limbs are fused along K,
    # so the +-1 selection products accumulate in f32 with ~2^-17 relative error.
    band = jnp.dot(p64, s_ref[...],
                   preferred_element_type=jnp.float32)  # [tm, 3*PAIR_W]
    dx = band[:, 0:PAIR_W]
    dy = band[:, PAIR_W:2 * PAIR_W]
    dz = band[:, 2 * PAIR_W:3 * PAIR_W]
    # eps is 0 on the Ca-Ca lane so the masked/top-k distance is not re-epsiloned.
    d = jnp.sqrt(dx * dx + dy * dy + dz * dz + eps)     # [tm, PAIR_W]

    # Replicate each pair distance to its 16 RBF lanes via an exact 0/1 matmul
    # (hi/lo limbs so the bf16 cast of d costs ~2^-17 relative, not 2^-9).
    d_hi = d.astype(jnp.bfloat16)
    d_lo = (d - d_hi.astype(jnp.float32)).astype(jnp.bfloat16)
    d2 = jnp.concatenate([d_hi, d_lo], axis=1)          # [tm, 2*PAIR_W]
    d_all = jnp.dot(d2, bc_ref[...],
                    preferred_element_type=jnp.float32)  # [tm, ACT_W]

    # one dense exp for all 25x16 RBF lanes (non-RBF lanes masked by band_m)
    z = (d_all - mu) * (1.0 / SIGMA)
    rbf = jnp.exp(-(z * z))

    # positional one-hot on lanes 0..65 (class code was routed through the
    # selection matmul to dx lane PAIR_W-1; integer codes <= 65 are exact)
    dpos = band[:, PAIR_W - 1:PAIR_W]
    onehot = (lane_f == dpos).astype(jnp.float32)        # [tm, ACT_W]
    act = onehot + band_m * rbf                          # fused [onehot | RBF | 0]

    # single fused edge projection (positional linear folded into w_fused)
    acc = jnp.dot(act.astype(jnp.bfloat16), w_ref[...],
                  preferred_element_type=jnp.float32) + b_ref[...]

    # LayerNorm over the edge_features dim
    mean = jnp.mean(acc, axis=-1, keepdims=True)
    var = jnp.mean(jnp.square(acc - mean), axis=-1, keepdims=True)
    out_ref[...] = ((acc - mean) * jax.lax.rsqrt(var + LN_EPS)) * g_ref[...] \
        + bb_ref[...]


# ------------------------- wrapper-side constants ----------------------------
def _build_constants():
    """Selection [64,384], broadcast [256,512], and lane metadata [8,512]."""
    # +-1 selection producing dx|dy|dz for the 25 pairs; hi and lo limbs share it.
    s = np.zeros((PK_W, 3 * PAIR_W), np.float32)
    eps = np.zeros((PAIR_W,), np.float32)
    for n in range(25):                                # natural pair order a*5+b
        a, b = divmod(n, 5)
        if a == _CA and b == _CA:
            s[30, n] = 1.0                             # masked top-k Ca-Ca -> dx
        else:
            eps[n] = 1e-6
            for k in range(3):
                s[3 * a + k, k * PAIR_W + n] = 1.0
                s[15 + 3 * b + k, k * PAIR_W + n] = -1.0
    s[31, PAIR_W - 1] = 1.0                            # route class code to dx[127]
    s64 = np.concatenate([s, s], axis=0)               # [64, 3*PAIR_W]

    # 0/1 broadcast: pair lane n -> its 16 RBF lanes; hi and lo limbs share it.
    bmat = np.zeros((PAIR_W, ACT_W), np.float32)
    lanes = np.zeros((8, ACT_W), np.float32)           # padded to 8 sublanes
    lanes[0, :] = np.arange(ACT_W, dtype=np.float32)   # lane index
    mu = np.linspace(D_MIN, D_MAX, NUM_RBF).astype(np.float32)
    for n in range(25):
        c0 = RBF_OFF + NUM_RBF * n
        bmat[n, c0:c0 + NUM_RBF] = 1.0
        lanes[1, c0:c0 + NUM_RBF] = mu
        lanes[2, c0:c0 + NUM_RBF] = 1.0
    bcast = np.concatenate([bmat, bmat], axis=0)       # [2*PAIR_W, ACT_W]
    lanes[3, :PAIR_W] = eps
    return s64, bcast, lanes


def _build_fused_weight(params):
    """Fold positional linear into w_edge and permute RBF blocks to natural order."""
    w_pos, b_pos, w_edge = params["w_pos"], params["b_pos"], params["w_edge"]
    Ef = w_edge.shape[1]
    w_head = w_edge[:NUM_POS]                          # [16, Ef]
    w_pos_edge = w_pos @ w_head                        # [66, Ef]
    b_fused = (b_pos @ w_head).astype(jnp.float32)     # [1, Ef] (added before LN)

    nat_to_ref = np.zeros(25, np.int32)
    for r, (a, b) in enumerate(REF_PAIRS):
        nat_to_ref[a * 5 + b] = r
    w_rbf = w_edge[NUM_POS:].reshape(25, NUM_RBF, Ef)[jnp.asarray(nat_to_ref)]

    w_fused = jnp.zeros((ACT_W, Ef), jnp.float32)
    w_fused = w_fused.at[:NUM_CLASSES].set(w_pos_edge)
    w_fused = w_fused.at[RBF_OFF:RBF_OFF + 25 * NUM_RBF].set(
        w_rbf.reshape(25 * NUM_RBF, Ef))
    return w_fused.astype(jnp.bfloat16), b_fused


def _round_up(x, m):
    return ((x + m - 1) // m) * m


# ------------------------------- wrapper ------------------------------------
def protein_features_pallas(X, mask, residue_idx, chain_labels, params,
                            top_k=30, tile_m=512):
    B, L = X.shape[0], X.shape[1]
    K = min(top_k, L)
    Ef = params["w_edge"].shape[1]

    N = X[:, :, 0, :]
    Ca = X[:, :, 1, :]
    C = X[:, :, 2, :]
    O = X[:, :, 3, :]
    bvec = Ca - N
    cvec = C - Ca
    avec = jnp.cross(bvec, cvec)
    Cb = -0.58273431 * avec + 0.56802827 * bvec - 0.54067466 * cvec + Ca

    # ---- _dist: masked Ca-Ca distances + top-k neighbor selection (JAX glue) ----
    mask2d = mask[:, None, :] * mask[:, :, None]
    dX = Ca[:, None, :, :] - Ca[:, :, None, :]
    D = mask2d * jnp.sqrt(jnp.sum(dX ** 2, -1) + 1e-6)
    D_max = jnp.max(D, -1, keepdims=True)
    D_adjust = D + (1.0 - mask2d) * D_max
    # TODO(synk): torch.topk(largest=False) tie ordering may differ from lax.top_k.
    neg_vals, E_idx = jax.lax.top_k(-D_adjust, K)
    D_neighbors = -neg_vals                                   # [B, L, K]

    # ---- gather neighbor atom coords and positional codes (JAX glue) -----------
    # TODO(synk): for very large B*L*K, scalar-prefetch E_idx and gather neighbor
    # atoms inside the kernel to avoid the [B,L,K,5,3] HBM round trip.
    atoms = jnp.stack([N, Ca, C, O, Cb], axis=2)              # [B, L, 5, 3]
    bidx = jnp.arange(B)[:, None, None]
    nbr = atoms[bidx, E_idx]                                  # [B, L, K, 5, 3]
    cen = jnp.broadcast_to(atoms[:, :, None], (B, L, K, 5, 3))

    offset = residue_idx[:, :, None] - residue_idx[bidx, E_idx]
    e_chains = (chain_labels[:, :, None] == chain_labels[bidx, E_idx]
                ).astype(jnp.int32)
    dcode = (jnp.clip(offset + MAX_REL, 0, 2 * MAX_REL) * e_chains
             + (1 - e_chains) * (2 * MAX_REL + 1))

    # ---- pack [M, 32] f32 edge stream, then split into bf16 hi|lo limbs --------
    M = B * L * K
    p = jnp.concatenate(
        [cen.reshape(B, L, K, 15), nbr.reshape(B, L, K, 15),
         D_neighbors[..., None], dcode[..., None].astype(jnp.float32)],
        axis=-1).reshape(M, PK_W).astype(jnp.float32)
    p_hi = p.astype(jnp.bfloat16)
    p_lo = (p - p_hi.astype(jnp.float32)).astype(jnp.bfloat16)
    p64 = jnp.concatenate([p_hi, p_lo], axis=-1)              # [M, 64] bf16

    # tile rows: multiple of 16, capped at tile_m; keep >= 2 grid steps when there
    # is enough work so both v7x TensorCores get a share of the parallel grid.
    m16 = _round_up(max(M, 1), 16)
    tm = max(16, min(int(tile_m), m16))
    tm = (tm // 16) * 16
    if m16 >= 256 and m16 <= tm:
        tm = _round_up(m16 // 2, 16)
    M_pad = _round_up(M, tm)
    if M_pad != M:
        p64 = jnp.pad(p64, ((0, M_pad - M), (0, 0)))

    s_np, bc_np, lanes_np = _build_constants()
    s64 = jnp.asarray(s_np, jnp.bfloat16)
    bcast = jnp.asarray(bc_np, jnp.bfloat16)
    lanes = jnp.asarray(lanes_np, jnp.float32)
    w_fused, b_fused = _build_fused_weight(params)
    gamma = params["gamma"].astype(jnp.float32).reshape(1, Ef)
    beta = params["beta"].astype(jnp.float32).reshape(1, Ef)

    out = pl.pallas_call(
        _edge_feature_kernel,
        out_shape=jax.ShapeDtypeStruct((M_pad, Ef), jnp.float32),
        grid_spec=pltpu.PrefetchScalarGridSpec(
            num_scalar_prefetch=0,
            grid=(M_pad // tm,),
            in_specs=[
                pl.BlockSpec((tm, 2 * PK_W), lambda i: (i, 0)),
                pl.BlockSpec((2 * PK_W, 3 * PAIR_W), lambda i: (0, 0)),
                pl.BlockSpec((2 * PAIR_W, ACT_W), lambda i: (0, 0)),
                pl.BlockSpec((8, ACT_W), lambda i: (0, 0)),
                pl.BlockSpec((ACT_W, Ef), lambda i: (0, 0)),
                pl.BlockSpec((1, Ef), lambda i: (0, 0)),
                pl.BlockSpec((1, Ef), lambda i: (0, 0)),
                pl.BlockSpec((1, Ef), lambda i: (0, 0)),
            ],
            out_specs=pl.BlockSpec((tm, Ef), lambda i: (i, 0)),
        ),
        compiler_params=pltpu.CompilerParams(
            dimension_semantics=("parallel",),
            vmem_limit_bytes=32 * 1024 * 1024),
    )(p64, s64, bcast, lanes, w_fused, b_fused, gamma, beta)

    return out[:M].reshape(B, L, K, Ef), E_idx


# ------------------------ pure-JAX reference (for checking) ------------------
def _rbf_ref(D):
    mu = jnp.linspace(D_MIN, D_MAX, NUM_RBF).reshape(1, 1, 1, -1)
    return jnp.exp(-(((D[..., None] - mu) / SIGMA) ** 2))


def _get_rbf_ref(A, B_, E_idx):
    D = jnp.sqrt(jnp.sum((A[:, :, None, :] - B_[:, None, :, :]) ** 2, -1) + 1e-6)
    Dn = jnp.take_along_axis(D, E_idx, axis=2)
    return _rbf_ref(Dn)


def protein_features_ref(X, mask, residue_idx, chain_labels, params, top_k=30):
    b = X[:, :, 1, :] - X[:, :, 0, :]
    c = X[:, :, 2, :] - X[:, :, 1, :]
    a = jnp.cross(b, c)
    Cb = -0.58273431 * a + 0.56802827 * b - 0.54067466 * c + X[:, :, 1, :]
    Ca, N, C, O = X[:, :, 1, :], X[:, :, 0, :], X[:, :, 2, :], X[:, :, 3, :]

    mask2d = mask[:, None, :] * mask[:, :, None]
    dX = Ca[:, None, :, :] - Ca[:, :, None, :]
    D = mask2d * jnp.sqrt(jnp.sum(dX ** 2, -1) + 1e-6)
    D_max = jnp.max(D, -1, keepdims=True)
    D_adjust = D + (1.0 - mask2d) * D_max
    K = min(top_k, X.shape[1])
    neg_vals, E_idx = jax.lax.top_k(-D_adjust, K)
    D_neighbors = -neg_vals

    atom = {_N: N, _CA: Ca, _C: C, _O: O, _CB: Cb}
    rbf_all = [_rbf_ref(D_neighbors)]
    for (ai, bi) in PAIRS:
        rbf_all.append(_get_rbf_ref(atom[ai], atom[bi], E_idx))
    RBF_all = jnp.concatenate(rbf_all, -1)

    offset = residue_idx[:, :, None] - residue_idx[:, None, :]
    offset = jnp.take_along_axis(offset, E_idx, axis=2)
    d_chains = (chain_labels[:, :, None] - chain_labels[:, None, :] == 0
                ).astype(jnp.int32)
    E_chains = jnp.take_along_axis(d_chains, E_idx, axis=2)
    d = (jnp.clip(offset + MAX_REL, 0, 2 * MAX_REL) * E_chains
         + (1 - E_chains) * (2 * MAX_REL + 1))
    d_onehot = jax.nn.one_hot(d, NUM_CLASSES, dtype=jnp.float32)
    E_pos = d_onehot @ params["w_pos"] + params["b_pos"]

    E = jnp.concatenate([E_pos, RBF_all], -1)
    E = E @ params["w_edge"]
    m = jnp.mean(E, -1, keepdims=True)
    v = jnp.mean((E - m) ** 2, -1, keepdims=True)
    E = (E - m) * jax.lax.rsqrt(v + LN_EPS) * params["gamma"] + params["beta"]
    return E, E_idx


# --------------------------------- main --------------------------------------
if __name__ == "__main__":
    B, L = 2, 8
    top_k = 30                 # module default; K = min(top_k, L) = 8 here
    edge_features = 128        # ProteinMPNN default hidden; lane-dense output

    key = jax.random.PRNGKey(0)
    k1, k2, k3, k4, k5, k6, k7 = jax.random.split(key, 7)

    X = jax.random.normal(k1, (B, L, 4, 3), jnp.float32) * 3.0
    mask = (jax.random.uniform(k2, (B, L)) > 0.1).astype(jnp.float32)
    residue_idx = jnp.broadcast_to(jnp.arange(L, dtype=jnp.int32), (B, L))
    chain_labels = jnp.broadcast_to(
        (jnp.arange(L) >= L // 2).astype(jnp.int32), (B, L))

    params = {
        "w_pos": 0.1 * jax.random.normal(k3, (NUM_CLASSES, NUM_POS), jnp.float32),
        "b_pos": 0.1 * jax.random.normal(k4, (1, NUM_POS), jnp.float32),
        "w_edge": 0.05 * jax.random.normal(k5, (EDGE_IN, edge_features),
                                           jnp.float32),
        "gamma": 1.0 + 0.1 * jax.random.normal(k6, (1, edge_features), jnp.float32),
        "beta": 0.1 * jax.random.normal(k7, (1, edge_features), jnp.float32),
    }

    E, E_idx = protein_features_pallas(X, mask, residue_idx, chain_labels,
                                       params, top_k=top_k)
    E = jax.block_until_ready(E)

    E_ref, E_idx_ref = protein_features_ref(X, mask, residue_idx, chain_labels,
                                            params, top_k=top_k)
    Kk = min(top_k, L)
    assert E.shape == (B, L, Kk, edge_features)
    assert E_idx.shape == (B, L, Kk)
    np.testing.assert_array_equal(np.asarray(E_idx), np.asarray(E_idx_ref))
    np.testing.assert_allclose(np.asarray(E), np.asarray(E_ref),
                               atol=5e-2, rtol=5e-2)
    print("KERNEL_OK")
</pallas_src>

<mosaic_0001>
module attributes {stable_mosaic.version = 11 : i64} {
  func.func @_edge_feature_kernel(%arg0: i32, %arg1: memref<128x64xbf16, #tpu.memory_space<vmem>>, %arg2: memref<64x384xbf16, #tpu.memory_space<vmem>>, %arg3: memref<256x512xbf16, #tpu.memory_space<vmem>>, %arg4: memref<8x512xf32, #tpu.memory_space<vmem>>, %arg5: memref<512x128xbf16, #tpu.memory_space<vmem>>, %arg6: memref<1x128xf32, #tpu.memory_space<vmem>>, %arg7: memref<1x128xf32, #tpu.memory_space<vmem>>, %arg8: memref<1x128xf32, #tpu.memory_space<vmem>>, %arg9: memref<128x128xf32, #tpu.memory_space<vmem>>) attributes {dimension_semantics = [#tpu.dimension_semantics<parallel>], iteration_bounds = array<i64: 1>, scalar_prefetch = 0 : i64, scratch_operands = 0 : i64, tpu.core_type = #tpu.core_type<tc>, window_params = [{transform_indices = @transform_0, window_bounds = array<i64: 128, 64>}, {pipeline_mode = #tpu.pipeline_mode<synchronous>, transform_indices = @transform_1, window_bounds = array<i64: 64, 384>}, {pipeline_mode = #tpu.pipeline_mode<synchronous>, transform_indices = @transform_2, window_bounds = array<i64: 256, 512>}, {pipeline_mode = #tpu.pipeline_mode<synchronous>, transform_indices = @transform_3, window_bounds = array<i64: 8, 512>}, {pipeline_mode = #tpu.pipeline_mode<synchronous>, transform_indices = @transform_4, window_bounds = array<i64: 512, 128>}, {pipeline_mode = #tpu.pipeline_mode<synchronous>, transform_indices = @transform_5, window_bounds = array<i64: 1, 128>}, {pipeline_mode = #tpu.pipeline_mode<synchronous>, transform_indices = @transform_6, window_bounds = array<i64: 1, 128>}, {pipeline_mode = #tpu.pipeline_mode<synchronous>, transform_indices = @transform_7, window_bounds = array<i64: 1, 128>}, {transform_indices = @transform_8, window_bounds = array<i64: 128, 128>}]} {
    %c0 = arith.constant 0 : index
    %c0_0 = arith.constant 0 : index
    %0 = vector.load %arg1[%c0, %c0_0] : memref<128x64xbf16, #tpu.memory_space<vmem>>, vector<128x64xbf16>
    %c0_1 = arith.constant 0 : index
    %c0_2 = arith.constant 0 : index
    %1 = vector.load %arg4[%c0_1, %c0_2] : memref<8x512xf32, #tpu.memory_space<vmem>>, vector<1x512xf32>
    %c1 = arith.constant 1 : index
    %c0_3 = arith.constant 0 : index
    %2 = vector.load %arg4[%c1, %c0_3] : memref<8x512xf32, #tpu.memory_space<vmem>>, vector<1x512xf32>
    %c2 = arith.constant 2 : index
    %c0_4 = arith.constant 0 : index
    %3 = vector.load %arg4[%c2, %c0_4] : memref<8x512xf32, #tpu.memory_space<vmem>>, vector<1x512xf32>
    %c3 = arith.constant 3 : index
    %c0_5 = arith.constant 0 : index
    %4 = vector.load %arg4[%c3, %c0_5] : memref<8x512xf32, #tpu.memory_space<vmem>>, vector<1x128xf32>
    %c0_6 = arith.constant 0 : index
    %c0_7 = arith.constant 0 : index
    %5 = vector.load %arg2[%c0_6, %c0_7] : memref<64x384xbf16, #tpu.memory_space<vmem>>, vector<64x384xbf16>
    %cst = arith.constant dense<0.000000e+00> : vector<128x384xf32>
    %6 = tpu.matmul %0, %5, %cst {dimension_numbers = #tpu.dot_dimension_numbers<[1], [0], [0], [1], [0, 0, 1, 1], [], []>} : vector<128x64xbf16>, vector<64x384xbf16>, vector<128x384xf32> -> vector<128x384xf32>
    %7 = vector.extract_strided_slice %6 {offsets = [0, 0], sizes = [128, 128], strides = [1, 1]} : vector<128x384xf32> to vector<128x128xf32>
    %8 = vector.extract_strided_slice %6 {offsets = [0, 128], sizes = [128, 128], strides = [1, 1]} : vector<128x384xf32> to vector<128x128xf32>
    %9 = vector.extract_strided_slice %6 {offsets = [0, 256], sizes = [128, 128], strides = [1, 1]} : vector<128x384xf32> to vector<128x128xf32>
    %10 = arith.mulf %7, %7 : vector<128x128xf32>
    %11 = arith.mulf %8, %8 : vector<128x128xf32>
    %12 = arith.addf %10, %11 : vector<128x128xf32>
    %13 = arith.mulf %9, %9 : vector<128x128xf32>
    %14 = arith.addf %12, %13 : vector<128x128xf32>
    %15 = vector.broadcast %4 : vector<1x128xf32> to vector<128x128xf32>
    %16 = arith.addf %14, %15 : vector<128x128xf32>
    %17 = math.sqrt %16 : vector<128x128xf32>
    %18 = arith.truncf %17 : vector<128x128xf32> to vector<128x128xbf16>
    %19 = arith.extf %18 : vector<128x128xbf16> to vector<128x128xf32>
    %20 = arith.subf %17, %19 : vector<128x128xf32>
    %21 = arith.truncf %20 : vector<128x128xf32> to vector<128x128xbf16>
    %22 = tpu.concatenate %18, %21 in 1 : vector<128x128xbf16>, vector<128x128xbf16> -> vector<128x256xbf16>
    %c0_8 = arith.constant 0 : index
    %c0_9 = arith.constant 0 : index
    %23 = vector.load %arg3[%c0_8, %c0_9] : memref<256x512xbf16, #tpu.memory_space<vmem>>, vector<256x512xbf16>
    %cst_10 = arith.constant dense<0.000000e+00> : vector<128x512xf32>
    %24 = tpu.matmul %22, %23, %cst_10 {dimension_numbers = #tpu.dot_dimension_numbers<[1], [0], [0], [1], [0, 0, 1, 1], [], []>} : vector<128x256xbf16>, vector<256x512xbf16>, vector<128x512xf32> -> vector<128x512xf32>
    %25 = vector.broadcast %2 : vector<1x512xf32> to vector<128x512xf32>
    %26 = arith.subf %24, %25 : vector<128x512xf32>
    %cst_11 = arith.constant 8.000000e-01 : f32
    %27 = vector.broadcast %cst_11 : f32 to vector<128x512xf32>
    %28 = arith.mulf %26, %27 : vector<128x512xf32>
    %29 = arith.mulf %28, %28 : vector<128x512xf32>
    %cst_12 = arith.constant 0.000000e+00 : f32
    %30 = vector.broadcast %cst_12 : f32 to vector<128x512xf32>
    %31 = arith.subf %30, %29 : vector<128x512xf32>
    %32 = math.exp %31 : vector<128x512xf32>
    %33 = vector.extract_strided_slice %6 {offsets = [0, 127], sizes = [128, 1], strides = [1, 1]} : vector<128x384xf32> to vector<128x1xf32>
    %34 = vector.broadcast %1 : vector<1x512xf32> to vector<128x512xf32>
    %35 = vector.broadcast %33 : vector<128x1xf32> to vector<128x512xf32>
    %36 = arith.cmpf oeq, %34, %35 : vector<128x512xf32>
    %37 = arith.extui %36 : vector<128x512xi1> to vector<128x512xi32>
    %38 = arith.sitofp %37 : vector<128x512xi32> to vector<128x512xf32>
    %39 = vector.broadcast %3 : vector<1x512xf32> to vector<128x512xf32>
    %40 = arith.mulf %39, %32 : vector<128x512xf32>
    %41 = arith.addf %38, %40 : vector<128x512xf32>
    %42 = arith.truncf %41 : vector<128x512xf32> to vector<128x512xbf16>
    %c0_13 = arith.constant 0 : index
    %c0_14 = arith.constant 0 : index
    %43 = vector.load %arg5[%c0_13, %c0_14] : memref<512x128xbf16, #tpu.memory_space<vmem>>, vector<512x128xbf16>
    %cst_15 = arith.constant dense<0.000000e+00> : vector<128x128xf32>
    %44 = tpu.matmul %42, %43, %cst_15 {dimension_numbers = #tpu.dot_dimension_numbers<[1], [0], [0], [1], [0, 0, 1, 1], [], []>} : vector<128x512xbf16>, vector<512x128xbf16>, vector<128x128xf32> -> vector<128x128xf32>
    %c0_16 = arith.constant 0 : index
    %c0_17 = arith.constant 0 : index
    %45 = vector.load %arg6[%c0_16, %c0_17] : memref<1x128xf32, #tpu.memory_space<vmem>>, vector<1x128xf32>
    %46 = vector.broadcast %45 : vector<1x128xf32> to vector<128x128xf32>
    %47 = arith.addf %44, %46 : vector<128x128xf32>
    %cst_18 = arith.constant dense<0.000000e+00> : vector<128xf32>
    %48 = vector.multi_reduction <add>, %47, %cst_18 [1] : vector<128x128xf32> to vector<128xf32>
    %49 = vector.shape_cast %48 : vector<128xf32> to vector<128x1xf32>
    %cst_19 = arith.constant 1.280000e+02 : f32
    %50 = vector.broadcast %cst_19 : f32 to vector<128x1xf32>
    %51 = arith.divf %49, %50 : vector<128x1xf32>
    %52 = vector.broadcast %51 : vector<128x1xf32> to vector<128x128xf32>
    %53 = arith.subf %47, %52 : vector<128x128xf32>
    %54 = arith.mulf %53, %53 : vector<128x128xf32>
    %cst_20 = arith.constant dense<0.000000e+00> : vector<128xf32>
    %55 = vector.multi_reduction <add>, %54, %cst_20 [1] : vector<128x128xf32> to vector<128xf32>
    %56 = vector.shape_cast %55 : vector<128xf32> to vector<128x1xf32>
    %cst_21 = arith.constant 1.280000e+02 : f32
    %57 = vector.broadcast %cst_21 : f32 to vector<128x1xf32>
    %58 = arith.divf %56, %57 : vector<128x1xf32>
    %59 = vector.broadcast %51 : vector<128x1xf32> to vector<128x128xf32>
    %60 = arith.subf %47, %59 : vector<128x128xf32>
    %cst_22 = arith.constant 9.99999974E-6 : f32
    %61 = vector.broadcast %cst_22 : f32 to vector<128x1xf32>
    %62 = arith.addf %58, %61 : vector<128x1xf32>
    %63 = math.rsqrt %62 : vector<128x1xf32>
    %64 = vector.broadcast %63 : vector<128x1xf32> to vector<128x128xf32>
    %65 = arith.mulf %60, %64 : vector<128x128xf32>
    %c0_23 = arith.constant 0 : index
    %c0_24 = arith.constant 0 : index
    %66 = vector.load %arg7[%c0_23, %c0_24] : memref<1x128xf32, #tpu.memory_space<vmem>>, vector<1x128xf32>
    %67 = vector.broadcast %66 : vector<1x128xf32> to vector<128x128xf32>
    %68 = arith.mulf %65, %67 : vector<128x128xf32>
    %c0_25 = arith.constant 0 : index
    %c0_26 = arith.constant 0 : index
    %69 = vector.load %arg8[%c0_25, %c0_26] : memref<1x128xf32, #tpu.memory_space<vmem>>, vector<1x128xf32>
    %70 = vector.broadcast %69 : vector<1x128xf32> to vector<128x128xf32>
    %71 = arith.addf %68, %70 : vector<128x128xf32>
    %c0_27 = arith.constant 0 : index
    %c0_28 = arith.constant 0 : index
    %72 = vector.load %arg9[%c0_27, %c0_28] : memref<128x128xf32, #tpu.memory_space<vmem>>, vector<128x128xf32>
    tpu.vector_store %arg9[%c0_27, %c0_28], %71 {strides = array<i32>} : memref<128x128xf32, #tpu.memory_space<vmem>>, vector<128x128xf32>,
    return
  }
  func.func @transform_0(%arg0: i32) -> (i32, i32) {
    %c0_i32 = arith.constant 0 : i32
    %c0_i32_0 = arith.constant 0 : i32
    return %arg0, %c0_i32 : i32, i32
  }
  func.func @transform_1(%arg0: i32) -> (i32, i32) {
    %c0_i32 = arith.constant 0 : i32
    %c0_i32_0 = arith.constant 0 : i32
    %c0_i32_1 = arith.constant 0 : i32
    return %c0_i32, %c0_i32_0 : i32, i32
  }
  func.func @transform_2(%arg0: i32) -> (i32, i32) {
    %c0_i32 = arith.constant 0 : i32
    %c0_i32_0 = arith.constant 0 : i32
    %c0_i32_1 = arith.constant 0 : i32
    return %c0_i32, %c0_i32_0 : i32, i32
  }
  func.func @transform_3(%arg0: i32) -> (i32, i32) {
    %c0_i32 = arith.constant 0 : i32
    %c0_i32_0 = arith.constant 0 : i32
    %c0_i32_1 = arith.constant 0 : i32
    return %c0_i32, %c0_i32_0 : i32, i32
  }
  func.func @transform_4(%arg0: i32) -> (i32, i32) {
    %c0_i32 = arith.constant 0 : i32
    %c0_i32_0 = arith.constant 0 : i32
    %c0_i32_1 = arith.constant 0 : i32
    return %c0_i32, %c0_i32_0 : i32, i32
  }
  func.func @transform_5(%arg0: i32) -> (i32, i32) {
    %c0_i32 = arith.constant 0 : i32
    %c0_i32_0 = arith.constant 0 : i32
    %c0_i32_1 = arith.constant 0 : i32
    return %c0_i32, %c0_i32_0 : i32, i32
  }
  func.func @transform_6(%arg0: i32) -> (i32, i32) {
    %c0_i32 = arith.constant 0 : i32
    %c0_i32_0 = arith.constant 0 : i32
    %c0_i32_1 = arith.constant 0 : i32
    return %c0_i32, %c0_i32_0 : i32, i32
  }
  func.func @transform_7(%arg0: i32) -> (i32, i32) {
    %c0_i32 = arith.constant 0 : i32
    %c0_i32_0 = arith.constant 0 : i32
    %c0_i32_1 = arith.constant 0 : i32
    return %c0_i32, %c0_i32_0 : i32, i32
  }
  func.func @transform_8(%arg0: i32) -> (i32, i32) {
    %c0_i32 = arith.constant 0 : i32
    %c0_i32_0 = arith.constant 0 : i32
    return %arg0, %c0_i32 : i32, i32
  }
}

</mosaic_0001>

<llo_original>
// kernel: tpu_custom_call.1
$region0: #{tpu_custom_call.1}
  #allocation0 [shape = 'u32[]', space=smem, size = 0x4, offset = 0x4, fixed_abs, tag = 'smem constant byte address 0x4 - core index']
  #allocation1 [shape = 'u32[144,128]{1,0:T(1,128)}', space=vmem, size = 0x12000, scoped, tag = 'internal scratch']
  %s0 = inlined_call_operand.vmem [shape: bf16[128,64], index: 0, kind: input, shape index: {}]
  %s1 = inlined_call_operand.vmem [shape: bf16[64,384], index: 1, kind: input, shape index: {}]
  %s2 = inlined_call_operand.hbm [shape: bf16[256,512], index: 2, kind: input, shape index: {}]
  %s3 = inlined_call_operand.hbm [shape: f32[8,512], index: 3, kind: input, shape index: {}]
  %s4 = inlined_call_operand.hbm [shape: bf16[512,128], index: 4, kind: input, shape index: {}]
  %s5 = inlined_call_operand.vmem [shape: f32[1,128], index: 5, kind: input, shape index: {}]
  %s6 = inlined_call_operand.vmem [shape: f32[1,128], index: 6, kind: input, shape index: {}]
  %s7 = inlined_call_operand.vmem [shape: f32[1,128], index: 7, kind: input, shape index: {}]
  %s8 = inlined_call_operand.hbm [shape: f32[128,128], index: 8, kind: output, shape index: {}]
  %s9 = sld [smem:[#allocation0]]
  $region54: #{tpu_custom_call.1} parent=0
    _
  %s11 = ssub.s32 1, %s9
  %s12 = scalar_select 0, %s11, %s9
  $region1: #{tpu_custom_call.1} parent=0
    #allocation2 [shape = 'u8[262144]{0}', space=vmem, size = 0x40000, scoped, tag = 'input window, operand 2, single buffered']
    #allocation3 [shape = 's32[1]{0}', space=sflag, size = 0x4, scoped, tag = 'scoped memory for tpu_custom_call.1']
    #allocation4 [shape = 's32[1]{0}', space=sflag, size = 0x4, scoped, tag = 'scoped memory for tpu_custom_call.1']
    #allocation5 [shape = 'u8[16384]{0}', space=vmem, size = 0x4000, scoped, tag = 'input window, operand 3, single buffered']
    #allocation6 [shape = 's32[1]{0}', space=sflag, size = 0x4, scoped, tag = 'scoped memory for tpu_custom_call.1']
    #allocation7 [shape = 'u8[131072]{0}', space=vmem, size = 0x20000, scoped, tag = 'input window, operand 4, single buffered']
    #allocation8 [shape = 'u8[65536]{0}', space=vmem, size = 0x10000, scoped, tag = 'output window, operand 0, single buffered']
    %13 = vsyncpa [#allocation3], 0
    %14 = vsyncpa [#allocation6], 0
    %15 = vsyncpa [#allocation4], 0
    // Predicated region
    $region2: #{tpu_custom_call.1} parent=1 // pred_check
      _
    $region3: #{tpu_custom_call.1} parent=1 // pred_check_branch
      %17 = sbr.rel (0) target = $region5
    $region4: #{tpu_custom_call.1} parent=1 // pred_region
      _
    $region5: #{tpu_custom_call.1} parent=1 // pred_fallthru
      _
    // Predicated region
    $region6: #{tpu_custom_call.1} parent=1 // pred_check
      _
    $region7: #{tpu_custom_call.1} parent=1 // pred_check_branch
      %19 = sbr.rel (0) target = $region9
    $region8: #{tpu_custom_call.1} parent=1 // pred_region
      _
    $region9: #{tpu_custom_call.1} parent=1 // pred_fallthru
      _
    // Predicated region
    $region10: #{tpu_custom_call.1} parent=1 // pred_check
      _
    $region11: #{tpu_custom_call.1} parent=1 // pred_check_branch
      %21 = sbr.rel (0) target = $region13
    $region12: #{tpu_custom_call.1} parent=1 // pred_region
      %s23 = ssub.s32 8192, 8192
      %24 = vsyncadd [#allocation3], %s23
      %s25 = sshll.u32 [#allocation2], 4
      %s26 = int_to_ptr.vmem [resolvable:$true] %s25
      %31 = dma.hbm_to_vmem [thread:$0]  %s2, 8192, %s26, [#allocation3], 256, 256, 16
    $region13: #{tpu_custom_call.1} parent=1 // pred_fallthru
      _
    // Predicated region
    $region14: #{tpu_custom_call.1} parent=1 // pred_check
      _
    $region15: #{tpu_custom_call.1} parent=1 // pred_check_branch
      %33 = sbr.rel (0) target = $region17
    $region16: #{tpu_custom_call.1} parent=1 // pred_region
      %s35 = ssub.s32 512, 512
      %36 = vsyncadd [#allocation6], %s35
      %s38 = sshll.u32 [#allocation5], 4
      %s39 = int_to_ptr.vmem [resolvable:$true] %s38
      %41 = dma.hbm_to_vmem [thread:$0]  %s3, 512, %s39, [#allocation6]
    $region17: #{tpu_custom_call.1} parent=1 // pred_fallthru
      _
    // Predicated region
    $region18: #{tpu_custom_call.1} parent=1 // pred_check
      _
    $region19: #{tpu_custom_call.1} parent=1 // pred_check_branch
      %43 = sbr.rel (0) target = $region21
    $region20: #{tpu_custom_call.1} parent=1 // pred_region
      %s45 = ssub.s32 4096, 4096
      %46 = vsyncadd [#allocation6], %s45
      %s47 = sshll.u32 [#allocation7], 4
      %s48 = int_to_ptr.vmem [resolvable:$true] %s47
      %53 = dma.hbm_to_vmem [thread:$0]  %s4, 4096, %s48, [#allocation6], 64, 64, 4
    $region21: #{tpu_custom_call.1} parent=1 // pred_fallthru
      _
    // Predicated region
    $region22: #{tpu_custom_call.1} parent=1 // pred_check
      _
    $region23: #{tpu_custom_call.1} parent=1 // pred_check_branch
      %55 = sbr.rel (0) target = $region25
    $region24: #{tpu_custom_call.1} parent=1 // pred_region
      _
    $region25: #{tpu_custom_call.1} parent=1 // pred_fallthru
      _
    // Predicated region
    $region26: #{tpu_custom_call.1} parent=1 // pred_check
      _
    $region27: #{tpu_custom_call.1} parent=1 // pred_check_branch
      %57 = sbr.rel (0) target = $region29
    $region28: #{tpu_custom_call.1} parent=1 // pred_region
      _
    $region29: #{tpu_custom_call.1} parent=1 // pred_fallthru
      _
    // Predicated region
    $region30: #{tpu_custom_call.1} parent=1 // pred_check
      _
    $region31: #{tpu_custom_call.1} parent=1 // pred_check_branch
      %59 = sbr.rel (0) target = $region33
    $region32: #{tpu_custom_call.1} parent=1 // pred_region
      _
    $region33: #{tpu_custom_call.1} parent=1 // pred_fallthru
      _
    // Predicated region
    $region34: #{tpu_custom_call.1} parent=1 // pred_check
      _
    $region35: #{tpu_custom_call.1} parent=1 // pred_check_branch
      %61 = sbr.rel (0) target = $region37
    $region36: #{tpu_custom_call.1} parent=1 // pred_region
      %62 = dma.done [#allocation3], 8192
    $region37: #{tpu_custom_call.1} parent=1 // pred_fallthru
      _
    // Predicated region
    $region38: #{tpu_custom_call.1} parent=1 // pred_check
      _
    $region39: #{tpu_custom_call.1} parent=1 // pred_check_branch
      %64 = sbr.rel (0) target = $region41
    $region40: #{tpu_custom_call.1} parent=1 // pred_region
      %65 = dma.done [#allocation6], 512
    $region41: #{tpu_custom_call.1} parent=1 // pred_fallthru
      _
    // Predicated region
    $region42: #{tpu_custom_call.1} parent=1 // pred_check
      _
    $region43: #{tpu_custom_call.1} parent=1 // pred_check_branch
      %67 = sbr.rel (0) target = $region45
    $region44: #{tpu_custom_call.1} parent=1 // pred_region
      %68 = dma.done [#allocation6], 4096
    $region45: #{tpu_custom_call.1} parent=1 // pred_fallthru
      _
    %v70 = vld [vmem:[%s0] sm:$0xf]
    %v71 = vld [vmem:[%s0 + $0x4] sm:$0xf]
    %v72 = vld [vmem:[%s0 + $0x8] sm:$0xf]
    %v73 = vld [vmem:[%s0 + $0xc] sm:$0xf]
    %v74 = vld [vmem:[%s0 + $0x10] sm:$0xf]
    %v75 = vld [vmem:[%s0 + $0x14] sm:$0xf]
    %v76 = vld [vmem:[%s0 + $0x18] sm:$0xf]
    %v77 = vld [vmem:[%s0 + $0x1c] sm:$0xf]
    %v78 = vld [vmem:[%s0 + $0x20] sm:$0xf]
    %v79 = vld [vmem:[%s0 + $0x24] sm:$0xf]
    %v80 = vld [vmem:[%s0 + $0x28] sm:$0xf]
    %v81 = vld [vmem:[%s0 + $0x2c] sm:$0xf]
    %v82 = vld [vmem:[%s0 + $0x30] sm:$0xf]
    %v83 = vld [vmem:[%s0 + $0x34] sm:$0xf]
    %v84 = vld [vmem:[%s0 + $0x38] sm:$0xf]
    %v85 = vld [vmem:[%s0 + $0x3c] sm:$0xf]
    %v86 = vld [vmem:[#allocation5] ss:$8 sm:$0xf]
    %s87 = scalar_lea.vmem [#allocation5], 1
    %v88 = vld [vmem:[%s87] ss:$8 sm:$0xf]
    %s89 = scalar_lea.vmem [#allocation5], 2
    %v90 = vld [vmem:[%s89] ss:$8 sm:$0xf]
    %v91 = vld [vmem:[#allocation5 + $0x3] ss:$0 sm:$0xff]
    %v92 = vld [vmem:[%s1] sm:$0xff]
    %v93 = vld [vmem:[%s1 + $0x8] sm:$0xf]
    %v94 = vld [vmem:[%s1 + $0xc] sm:$0xff]
    %v95 = vld [vmem:[%s1 + $0x14] sm:$0xf]
    %v96 = vld [vmem:[%s1 + $0x18] sm:$0xff]
    %v97 = vld [vmem:[%s1 + $0x20] sm:$0xf]
    %v98 = vld [vmem:[%s1 + $0x24] sm:$0xff]
    %v99 = vld [vmem:[%s1 + $0x2c] sm:$0xf]
    %v100 = vld [vmem:[%s1 + $0x30] sm:$0xff]
    %v101 = vld [vmem:[%s1 + $0x38] sm:$0xf]
    %v102 = vld [vmem:[%s1 + $0x3c] sm:$0xff]
    %v103 = vld [vmem:[%s1 + $0x44] sm:$0xf]
    %v104 = vld [vmem:[%s1 + $0x48] sm:$0xff]
    %v105 = vld [vmem:[%s1 + $0x50] sm:$0xf]
    %v106 = vld [vmem:[%s1 + $0x54] sm:$0xff]
    %v107 = vld [vmem:[%s1 + $0x5c] sm:$0xf]
    %v124 = vunpack.c.l.b16 %v70
    %v125 = vunpack.c.l.b16 %v71
    %v126 = vunpack.c.l.b16 %v72
    %v127 = vunpack.c.l.b16 %v73
    %v128 = vunpack.c.l.b16 %v74
    %v129 = vunpack.c.l.b16 %v75
    %v130 = vunpack.c.l.b16 %v76
    %v131 = vunpack.c.l.b16 %v77
    %v132 = vunpack.c.l.b16 %v78
    %v133 = vunpack.c.l.b16 %v79
    %v134 = vunpack.c.l.b16 %v80
    %v135 = vunpack.c.l.b16 %v81
    %v136 = vunpack.c.l.b16 %v82
    %v137 = vunpack.c.l.b16 %v83
    %v138 = vunpack.c.l.b16 %v84
    %v139 = vunpack.c.l.b16 %v85
    %v140 = vpack.c.b16 %v125, %v124
    %v141 = vpack.c.b16 %v127, %v126
    %v142 = vpack.c.b16 %v129, %v128
    %v143 = vpack.c.b16 %v131, %v130
    %v144 = vpack.c.b16 %v133, %v132
    %v145 = vpack.c.b16 %v135, %v134
    %v146 = vpack.c.b16 %v137, %v136
    %v147 = vpack.c.b16 %v139, %v138
    %v164 = vunpack.c.l.b16 %v92
    %v165 = vunpack.c.h.b16 %v92
    %v166 = vunpack.c.l.b16 %v93
    %v167 = vunpack.c.l.b16 %v94
    %v168 = vunpack.c.h.b16 %v94
    %v169 = vunpack.c.l.b16 %v95
    %v170 = vunpack.c.l.b16 %v96
    %v171 = vunpack.c.h.b16 %v96
    %v172 = vunpack.c.l.b16 %v97
    %v173 = vunpack.c.l.b16 %v98
    %v174 = vunpack.c.h.b16 %v98
    %v175 = vunpack.c.l.b16 %v99
    %v176 = vunpack.c.l.b16 %v100
    %v177 = vunpack.c.h.b16 %v100
    %v178 = vunpack.c.l.b16 %v101
    %v179 = vunpack.c.l.b16 %v102
    %v180 = vunpack.c.h.b16 %v102
    %v181 = vunpack.c.l.b16 %v103
    %v182 = vunpack.c.l.b16 %v104
    %v183 = vunpack.c.h.b16 %v104
    %v184 = vunpack.c.l.b16 %v105
    %v185 = vunpack.c.l.b16 %v106
    %v186 = vunpack.c.h.b16 %v106
    %v187 = vunpack.c.l.b16 %v107
    %v188 = vpack.c.b16 %v167, %v164
    %v189 = vpack.c.b16 %v168, %v165
    %v190 = vpack.c.b16 %v169, %v166
    %v191 = vpack.c.b16 %v173, %v170
    %v192 = vpack.c.b16 %v174, %v171
    %v193 = vpack.c.b16 %v175, %v172
    %v194 = vpack.c.b16 %v179, %v176
    %v195 = vpack.c.b16 %v180, %v177
    %v196 = vpack.c.b16 %v181, %v178
    %v197 = vpack.c.b16 %v185, %v182
    %v198 = vpack.c.b16 %v186, %v183
    %v199 = vpack.c.b16 %v187, %v184
    %vm212 = vcmask 523264
    %v214 = vsel %vm212, %v140, 0
    %v217 = vsel %vm212, %v141, 0
    %v220 = vsel %vm212, %v142, 0
    %v223 = vsel %vm212, %v143, 0
    %v226 = vsel %vm212, %v144, 0
    %v229 = vsel %vm212, %v145, 0
    %v232 = vsel %vm212, %v146, 0
    %v235 = vsel %vm212, %v147, 0
    %237 = vmatprep.subr.bf16.mxu0 %v189
    %238 = vmatpush1.bf16.msra.mxu0 %v188
    %239 = vmatprep.subr.bf16.mxu0 %v192
    %240 = vmatpush1.bf16.msra.mxu0 %v191
    %241 = vmatprep.subr.bf16.mxu0 %v195
    %242 = vmatpush1.bf16.msra.mxu0 %v194
    %243 = vmatprep.subr.bf16.mxu0 %v198
    %244 = vmatpush1.bf16.msra.mxu0 %v197
    %245 = vmatprep.subr.bf16.mxu0 0
    %246 = vmatpush1.bf16.msra.mxu0 0
    %247 = vmatprep.subr.bf16.mxu0 0
    %248 = vmatpush1.bf16.msra.mxu0 0
    %249 = vmatprep.subr.bf16.mxu0 0
    %250 = vmatpush1.bf16.msra.mxu0 0
    %251 = vmatprep.subr.bf16.mxu0 0
    %252 = vmatpush1.bf16.msra.mxu0 0
    %253 = vmatprep.subr.bf16.mxu0 0
    %254 = vmatpush1.bf16.msra.mxu0 0
    %255 = vmatprep.subr.bf16.mxu0 0
    %256 = vmatpush1.bf16.msra.mxu0 0
    %257 = vmatprep.subr.bf16.mxu0 0
    %258 = vmatpush1.bf16.msra.mxu0 0
    %259 = vmatprep.subr.bf16.mxu0 0
    %260 = vmatpush1.bf16.msra.mxu0 0
    %261 = vmatprep.subr.bf16.mxu0 0
    %262 = vmatpush1.bf16.msra.mxu0 0
    %263 = vmatprep.subr.bf16.mxu0 0
    %264 = vmatpush1.bf16.msra.mxu0 0
    %265 = vmatprep.subr.bf16.mxu0 0
    %266 = vmatpush1.bf16.msra.mxu0 0
    %267 = vmatprep.subr.bf16.mxu0 0
    %268 = vmatpush1.bf16.msra.mxu0 0
    %269 = vmatprep.mubr.bf16.mxu0 0
    %270 = vmatmul.mubr.bf16.gmra.mrb[0].mxu0 %v214
    %v271 = vpop.f32.mrb[0].mxu0
    %v272 = vadd.f32 0.0, %v271
    %v273 = vpop.f32.mrb[0].mxu0
    %v274 = vadd.f32 0.0, %v273
    %v275 = vpop.f32.mrb[0].mxu0
    %v276 = vadd.f32 0.0, %v275
    %v277 = vpop.f32.mrb[0].mxu0
    %v278 = vadd.f32 0.0, %v277
    %279 = vmatprep.mubr.bf16.mxu0 0
    %280 = vmatmul.mubr.bf16.gmra.mrb[0].mxu0 %v217
    %v281 = vpop.f32.mrb[0].mxu0
    %v282 = vadd.f32 0.0, %v281
    %v283 = vpop.f32.mrb[0].mxu0
    %v284 = vadd.f32 0.0, %v283
    %v285 = vpop.f32.mrb[0].mxu0
    %v286 = vadd.f32 0.0, %v285
    %v287 = vpop.f32.mrb[0].mxu0
    %v288 = vadd.f32 0.0, %v287
    %289 = vmatprep.mubr.bf16.mxu0 0
    %290 = vmatmul.mubr.bf16.gmra.mrb[0].mxu0 %v220
    %v291 = vpop.f32.mrb[0].mxu0
    %v292 = vadd.f32 0.0, %v291
    %v293 = vpop.f32.mrb[0].mxu0
    %v294 = vadd.f32 0.0, %v293
    %v295 = vpop.f32.mrb[0].mxu0
    %v296 = vadd.f32 0.0, %v295
    %v297 = vpop.f32.mrb[0].mxu0
    %v298 = vadd.f32 0.0, %v297
    %299 = vmatprep.mubr.bf16.mxu0 0
    %300 = vmatmul.mubr.bf16.gmra.mrb[0].mxu0 %v223
    %v301 = vpop.f32.mrb[0].mxu0
    %v302 = vadd.f32 0.0, %v301
    %v303 = vpop.f32.mrb[0].mxu0
    %v304 = vadd.f32 0.0, %v303
    %v305 = vpop.f32.mrb[0].mxu0
    %v306 = vadd.f32 0.0, %v305
    %v307 = vpop.f32.mrb[0].mxu0
    %v308 = vadd.f32 0.0, %v307
    %309 = vmatprep.mubr.bf16.mxu0 0
    %310 = vmatmul.mubr.bf16.gmra.mrb[0].mxu0 %v226
    %v311 = vpop.f32.mrb[0].mxu0
    %v312 = vadd.f32 0.0, %v311
    %v313 = vpop.f32.mrb[0].mxu0
    %v314 = vadd.f32 0.0, %v313
    %v315 = vpop.f32.mrb[0].mxu0
    %v316 = vadd.f32 0.0, %v315
    %v317 = vpop.f32.mrb[0].mxu0
    %v318 = vadd.f32 0.0, %v317
    %319 = vmatprep.mubr.bf16.mxu0 0
    %320 = vmatmul.mubr.bf16.gmra.mrb[0].mxu0 %v229
    %v321 = vpop.f32.mrb[0].mxu0
    %v322 = vadd.f32 0.0, %v321
    %v323 = vpop.f32.mrb[0].mxu0
    %v324 = vadd.f32 0.0, %v323
    %v325 = vpop.f32.mrb[0].mxu0
    %v326 = vadd.f32 0.0, %v325
    %v327 = vpop.f32.mrb[0].mxu0
    %v328 = vadd.f32 0.0, %v327
    %329 = vmatprep.mubr.bf16.mxu0 0
    %330 = vmatmul.mubr.bf16.gmra.mrb[0].mxu0 %v232
    %v331 = vpop.f32.mrb[0].mxu0
    %v332 = vadd.f32 0.0, %v331
    %v333 = vpop.f32.mrb[0].mxu0
    %v334 = vadd.f32 0.0, %v333
    %v335 = vpop.f32.mrb[0].mxu0
    %v336 = vadd.f32 0.0, %v335
    %v337 = vpop.f32.mrb[0].mxu0
    %v338 = vadd.f32 0.0, %v337
    %339 = vmatprep.mubr.bf16.mxu0 0
    %340 = vmatmul.mubr.bf16.gmra.mrb[0].mxu0 %v235
    %v341 = vpop.f32.mrb[0].mxu0
    %v342 = vadd.f32 0.0, %v341
    %v343 = vpop.f32.mrb[0].mxu0
    %v344 = vadd.f32 0.0, %v343
    %v345 = vpop.f32.mrb[0].mxu0
    %v346 = vadd.f32 0.0, %v345
    %v347 = vpop.f32.mrb[0].mxu0
    %v348 = vadd.f32 0.0, %v347
    %349 = vdwg.mxu0
    %350 = vmatprep.subr.bf16.mxu0 0
    %351 = vmatpush1.bf16.msra.mxu0 %v190
    %352 = vmatprep.subr.bf16.mxu0 0
    %353 = vmatpush1.bf16.msra.mxu0 %v193
    %354 = vmatprep.subr.bf16.mxu0 0
    %355 = vmatpush1.bf16.msra.mxu0 %v196
    %356 = vmatprep.subr.bf16.mxu0 0
    %357 = vmatpush1.bf16.msra.mxu0 %v199
    %358 = vmatprep.subr.bf16.mxu0 0
    %359 = vmatpush1.bf16.msra.mxu0 0
    %360 = vmatprep.subr.bf16.mxu0 0
    %361 = vmatpush1.bf16.msra.mxu0 0
    %362 = vmatprep.subr.bf16.mxu0 0
    %363 = vmatpush1.bf16.msra.mxu0 0
    %364 = vmatprep.subr.bf16.mxu0 0
    %365 = vmatpush1.bf16.msra.mxu0 0
    %366 = vmatprep.subr.bf16.mxu0 0
    %367 = vmatpush1.bf16.msra.mxu0 0
    %368 = vmatprep.subr.bf16.mxu0 0
    %369 = vmatpush1.bf16.msra.mxu0 0
    %370 = vmatprep.subr.bf16.mxu0 0
    %371 = vmatpush1.bf16.msra.mxu0 0
    %372 = vmatprep.subr.bf16.mxu0 0
    %373 = vmatpush1.bf16.msra.mxu0 0
    %374 = vmatprep.subr.bf16.mxu0 0
    %375 = vmatpush1.bf16.msra.mxu0 0
    %376 = vmatprep.subr.bf16.mxu0 0
    %377 = vmatpush1.bf16.msra.mxu0 0
    %378 = vmatprep.subr.bf16.mxu0 0
    %379 = vmatpush1.bf16.msra.mxu0 0
    %380 = vmatprep.subr.bf16.mxu0 0
    %381 = vmatpush1.bf16.msra.mxu0 0
    %382 = vmatprep.mubr.bf16.mxu0 0
    %383 = vmatmul.mubr.bf16.gmra.mrb[0].mxu0 %v214
    %v384 = vpop.f32.mrb[0].mxu0
    %v385 = vadd.f32 0.0, %v384
    %v386 = vpop.f32.mrb[0].mxu0
    %v387 = vpop.f32.mrb[0].mxu0
    %v388 = vadd.f32 0.0, %v387
    %v389 = vpop.f32.mrb[0].mxu0
    %390 = vmatprep.mubr.bf16.mxu0 0
    %391 = vmatmul.mubr.bf16.gmra.mrb[0].mxu0 %v217
    %v392 = vpop.f32.mrb[0].mxu0
    %v393 = vadd.f32 0.0, %v392
    %v394 = vpop.f32.mrb[0].mxu0
    %v395 = vpop.f32.mrb[0].mxu0
    %v396 = vadd.f32 0.0, %v395
    %v397 = vpop.f32.mrb[0].mxu0
    %398 = vmatprep.mubr.bf16.mxu0 0
    %399 = vmatmul.mubr.bf16.gmra.mrb[0].mxu0 %v220
    %v400 = vpop.f32.mrb[0].mxu0
    %v401 = vadd.f32 0.0, %v400
    %v402 = vpop.f32.mrb[0].mxu0
    %v403 = vpop.f32.mrb[0].mxu0
    %v404 = vadd.f32 0.0, %v403
    %v405 = vpop.f32.mrb[0].mxu0
    %406 = vmatprep.mubr.bf16.mxu0 0
    %407 = vmatmul.mubr.bf16.gmra.mrb[0].mxu0 %v223
    %v408 = vpop.f32.mrb[0].mxu0
    %v409 = vadd.f32 0.0, %v408
    %v410 = vpop.f32.mrb[0].mxu0
    %v411 = vpop.f32.mrb[0].mxu0
    %v412 = vadd.f32 0.0, %v411
    %v413 = vpop.f32.mrb[0].mxu0
    %414 = vmatprep.mubr.bf16.mxu0 0
    %415 = vmatmul.mubr.bf16.gmra.mrb[0].mxu0 %v226
    %v416 = vpop.f32.mrb[0].mxu0
    %v417 = vadd.f32 0.0, %v416
    %v418 = vpop.f32.mrb[0].mxu0
    %v419 = vpop.f32.mrb[0].mxu0
    %v420 = vadd.f32 0.0, %v419
    %v421 = vpop.f32.mrb[0].mxu0
    %422 = vmatprep.mubr.bf16.mxu0 0
    %423 = vmatmul.mubr.bf16.gmra.mrb[0].mxu0 %v229
    %v424 = vpop.f32.mrb[0].mxu0
    %v425 = vadd.f32 0.0, %v424
    %v426 = vpop.f32.mrb[0].mxu0
    %v427 = vpop.f32.mrb[0].mxu0
    %v428 = vadd.f32 0.0, %v427
    %v429 = vpop.f32.mrb[0].mxu0
    %430 = vmatprep.mubr.bf16.mxu0 0
    %431 = vmatmul.mubr.bf16.gmra.mrb[0].mxu0 %v232
    %v432 = vpop.f32.mrb[0].mxu0
    %v433 = vadd.f32 0.0, %v432
    %v434 = vpop.f32.mrb[0].mxu0
    %v435 = vpop.f32.mrb[0].mxu0
    %v436 = vadd.f32 0.0, %v435
    %v437 = vpop.f32.mrb[0].mxu0
    %438 = vmatprep.mubr.bf16.mxu0 0
    %439 = vmatmul.mubr.bf16.gmra.mrb[0].mxu0 %v235
    %v440 = vpop.f32.mrb[0].mxu0
    %v441 = vadd.f32 0.0, %v440
    %v442 = vpop.f32.mrb[0].mxu0
    %v443 = vpop.f32.mrb[0].mxu0
    %v444 = vadd.f32 0.0, %v443
    %v445 = vpop.f32.mrb[0].mxu0
    %446 = vdwg.mxu0
    %v447 = vmul.f32 %v272, %v272
    %v448 = vmul.f32 %v276, %v276
    %v449 = vmul.f32 %v282, %v282
    %v450 = vmul.f32 %v286, %v286
    %v451 = vmul.f32 %v292, %v292
    %v452 = vmul.f32 %v296, %v296
    %v453 = vmul.f32 %v302, %v302
    %v454 = vmul.f32 %v306, %v306
    %v455 = vmul.f32 %v312, %v312
    %v456 = vmul.f32 %v316, %v316
    %v457 = vmul.f32 %v322, %v322
    %v458 = vmul.f32 %v326, %v326
    %v459 = vmul.f32 %v332, %v332
    %v460 = vmul.f32 %v336, %v336
    %v461 = vmul.f32 %v342, %v342
    %v462 = vmul.f32 %v346, %v346
    %v463 = vmul.f32 %v274, %v274
    %v464 = vmul.f32 %v278, %v278
    %v465 = vmul.f32 %v284, %v284
    %v466 = vmul.f32 %v288, %v288
    %v467 = vmul.f32 %v294, %v294
    %v468 = vmul.f32 %v298, %v298
    %v469 = vmul.f32 %v304, %v304
    %v470 = vmul.f32 %v308, %v308
    %v471 = vmul.f32 %v314, %v314
    %v472 = vmul.f32 %v318, %v318
    %v473 = vmul.f32 %v324, %v324
    %v474 = vmul.f32 %v328, %v328
    %v475 = vmul.f32 %v334, %v334
    %v476 = vmul.f32 %v338, %v338
    %v477 = vmul.f32 %v344, %v344
    %v478 = vmul.f32 %v348, %v348
    %v479 = vadd.f32 %v447, %v463
    %v480 = vadd.f32 %v448, %v464
    %v481 = vadd.f32 %v449, %v465
    %v482 = vadd.f32 %v450, %v466
    %v483 = vadd.f32 %v451, %v467
    %v484 = vadd.f32 %v452, %v468
    %v485 = vadd.f32 %v453, %v469
    %v486 = vadd.f32 %v454, %v470
    %v487 = vadd.f32 %v455, %v471
    %v488 = vadd.f32 %v456, %v472
    %v489 = vadd.f32 %v457, %v473
    %v490 = vadd.f32 %v458, %v474
    %v491 = vadd.f32 %v459, %v475
    %v492 = vadd.f32 %v460, %v476
    %v493 = vadd.f32 %v461, %v477
    %v494 = vadd.f32 %v462, %v478
    %v495 = vmul.f32 %v385, %v385
    %v496 = vmul.f32 %v388, %v388
    %v497 = vmul.f32 %v393, %v393
    %v498 = vmul.f32 %v396, %v396
    %v499 = vmul.f32 %v401, %v401
    %v500 = vmul.f32 %v404, %v404
    %v501 = vmul.f32 %v409, %v409
    %v502 = vmul.f32 %v412, %v412
    %v503 = vmul.f32 %v417, %v417
    %v504 = vmul.f32 %v420, %v420
    %v505 = vmul.f32 %v425, %v425
    %v506 = vmul.f32 %v428, %v428
    %v507 = vmul.f32 %v433, %v433
    %v508 = vmul.f32 %v436, %v436
    %v509 = vmul.f32 %v441, %v441
    %v510 = vmul.f32 %v444, %v444
    %v511 = vadd.f32 %v479, %v495
    %v512 = vadd.f32 %v480, %v496
    %v513 = vadd.f32 %v481, %v497
    %v514 = vadd.f32 %v482, %v498
    %v515 = vadd.f32 %v483, %v499
    %v516 = vadd.f32 %v484, %v500
    %v517 = vadd.f32 %v485, %v501
    %v518 = vadd.f32 %v486, %v502
    %v519 = vadd.f32 %v487, %v503
    %v520 = vadd.f32 %v488, %v504
    %v521 = vadd.f32 %v489, %v505
    %v522 = vadd.f32 %v490, %v506
    %v523 = vadd.f32 %v491, %v507
    %v524 = vadd.f32 %v492, %v508
    %v525 = vadd.f32 %v493, %v509
    %v526 = vadd.f32 %v494, %v510
    %v527 = vadd.f32 %v511, %v91
    %v528 = vadd.f32 %v512, %v91
    %v529 = vadd.f32 %v513, %v91
    %v530 = vadd.f32 %v514, %v91
    %v531 = vadd.f32 %v515, %v91
    %v532 = vadd.f32 %v516, %v91
    %v533 = vadd.f32 %v517, %v91
    %v534 = vadd.f32 %v518, %v91
    %v535 = vadd.f32 %v519, %v91
    %v536 = vadd.f32 %v520, %v91
    %v537 = vadd.f32 %v521, %v91
    %v538 = vadd.f32 %v522, %v91
    %v539 = vadd.f32 %v523, %v91
    %v540 = vadd.f32 %v524, %v91
    %v541 = vadd.f32 %v525, %v91
    %v542 = vadd.f32 %v526, %v91
    %v543 = vrsqrt.pop %v527
    %v544 = vmul.f32 %v527, %v543
    %vm545 = vcmp.eq.f32.partialorder %v527, inf
    %v546 = vsel %vm545, %v527, %v544
    %vm547 = vcmp.eq.f32.partialorder %v527, 0.0
    %v548 = vand.u32 %v527, 2147483648
    %v549 = vsel %vm547, %v548, %v546
    %v550 = vrsqrt.pop %v528
    %v551 = vmul.f32 %v528, %v550
    %vm552 = vcmp.eq.f32.partialorder %v528, inf
    %v553 = vsel %vm552, %v528, %v551
    %vm554 = vcmp.eq.f32.partialorder %v528, 0.0
    %v555 = vand.u32 %v528, 2147483648
    %v556 = vsel %vm554, %v555, %v553
    %v557 = vrsqrt.pop %v529
    %v558 = vmul.f32 %v529, %v557
    %vm559 = vcmp.eq.f32.partialorder %v529, inf
    %v560 = vsel %vm559, %v529, %v558
    %vm561 = vcmp.eq.f32.partialorder %v529, 0.0
    %v562 = vand.u32 %v529, 2147483648
    %v563 = vsel %vm561, %v562, %v560
    %v564 = vrsqrt.pop %v530
    %v565 = vmul.f32 %v530, %v564
    %vm566 = vcmp.eq.f32.partialorder %v530, inf
    %v567 = vsel %vm566, %v530, %v565
    %vm568 = vcmp.eq.f32.partialorder %v530, 0.0
    %v569 = vand.u32 %v530, 2147483648
    %v570 = vsel %vm568, %v569, %v567
    %v571 = vrsqrt.pop %v531
    %v572 = vmul.f32 %v531, %v571
    %vm573 = vcmp.eq.f32.partialorder %v531, inf
    %v574 = vsel %vm573, %v531, %v572
    %vm575 = vcmp.eq.f32.partialorder %v531, 0.0
    %v576 = vand.u32 %v531, 2147483648
    %v577 = vsel %vm575, %v576, %v574
    %v578 = vrsqrt.pop %v532
    %v579 = vmul.f32 %v532, %v578
    %vm580 = vcmp.eq.f32.partialorder %v532, inf
    %v581 = vsel %vm580, %v532, %v579
    %vm582 = vcmp.eq.f32.partialorder %v532, 0.0
    %v583 = vand.u32 %v532, 2147483648
    %v584 = vsel %vm582, %v583, %v581
    %v585 = vrsqrt.pop %v533
    %v586 = vmul.f32 %v533, %v585
    %vm587 = vcmp.eq.f32.partialorder %v533, inf
    %v588 = vsel %vm587, %v533, %v586
    %vm589 = vcmp.eq.f32.partialorder %v533, 0.0
    %v590 = vand.u32 %v533, 2147483648
    %v591 = vsel %vm589, %v590, %v588
    %v592 = vrsqrt.pop %v534
    %v593 = vmul.f32 %v534, %v592
    %vm594 = vcmp.eq.f32.partialorder %v534, inf
    %v595 = vsel %vm594, %v534, %v593
    %vm596 = vcmp.eq.f32.partialorder %v534, 0.0
    %v597 = vand.u32 %v534, 2147483648
    %v598 = vsel %vm596, %v597, %v595
    %v599 = vrsqrt.pop %v535
    %v600 = vmul.f32 %v535, %v599
    %vm601 = vcmp.eq.f32.partialorder %v535, inf
    %v602 = vsel %vm601, %v535, %v600
    %vm603 = vcmp.eq.f32.partialorder %v535, 0.0
    %v604 = vand.u32 %v535, 2147483648
    %v605 = vsel %vm603, %v604, %v602
    %v606 = vrsqrt.pop %v536
    %v607 = vmul.f32 %v536, %v606
    %vm608 = vcmp.eq.f32.partialorder %v536, inf
    %v609 = vsel %vm608, %v536, %v607
    %vm610 = vcmp.eq.f32.partialorder %v536, 0.0
    %v611 = vand.u32 %v536, 2147483648
    %v612 = vsel %vm610, %v611, %v609
    %v613 = vrsqrt.pop %v537
    %v614 = vmul.f32 %v537, %v613
    %vm615 = vcmp.eq.f32.partialorder %v537, inf
    %v616 = vsel %vm615, %v537, %v614
    %vm617 = vcmp.eq.f32.partialorder %v537, 0.0
    %v618 = vand.u32 %v537, 2147483648
    %v619 = vsel %vm617, %v618, %v616
    %v620 = vrsqrt.pop %v538
    %v621 = vmul.f32 %v538, %v620
    %vm622 = vcmp.eq.f32.partialorder %v538, inf
    %v623 = vsel %vm622, %v538, %v621
    %vm624 = vcmp.eq.f32.partialorder %v538, 0.0
    %v625 = vand.u32 %v538, 2147483648
    %v626 = vsel %vm624, %v625, %v623
    %v627 = vrsqrt.pop %v539
    %v628 = vmul.f32 %v539, %v627
    %vm629 = vcmp.eq.f32.partialorder %v539, inf
    %v630 = vsel %vm629, %v539, %v628
    %vm631 = vcmp.eq.f32.partialorder %v539, 0.0
    %v632 = vand.u32 %v539, 2147483648
    %v633 = vsel %vm631, %v632, %v630
    %v634 = vrsqrt.pop %v540
    %v635 = vmul.f32 %v540, %v634
    %vm636 = vcmp.eq.f32.partialorder %v540, inf
    %v637 = vsel %vm636, %v540, %v635
    %vm638 = vcmp.eq.f32.partialorder %v540, 0.0
    %v639 = vand.u32 %v540, 2147483648
    %v640 = vsel %vm638, %v639, %v637
    %v641 = vrsqrt.pop %v541
    %v642 = vmul.f32 %v541, %v641
    %vm643 = vcmp.eq.f32.partialorder %v541, inf
    %v644 = vsel %vm643, %v541, %v642
    %vm645 = vcmp.eq.f32.partialorder %v541, 0.0
    %v646 = vand.u32 %v541, 2147483648
    %v647 = vsel %vm645, %v646, %v644
    %v648 = vrsqrt.pop %v542
    %v649 = vmul.f32 %v542, %v648
    %vm650 = vcmp.eq.f32.partialorder %v542, inf
    %v651 = vsel %vm650, %v542, %v649
    %vm652 = vcmp.eq.f32.partialorder %v542, 0.0
    %v653 = vand.u32 %v542, 2147483648
    %v654 = vsel %vm652, %v653, %v651
    %v655 = vpack.c.bf16 %v556, %v549
    %v656 = vpack.c.bf16 %v570, %v563
    %v657 = vpack.c.bf16 %v584, %v577
    %v658 = vpack.c.bf16 %v598, %v591
    %v659 = vpack.c.bf16 %v612, %v605
    %v660 = vpack.c.bf16 %v626, %v619
    %v661 = vpack.c.bf16 %v640, %v633
    %v662 = vpack.c.bf16 %v654, %v647
    %v663 = vunpack.c.l.bf16 %v655
    %v664 = vunpack.c.h.bf16 %v655
    %v665 = vunpack.c.l.bf16 %v656
    %v666 = vunpack.c.h.bf16 %v656
    %v667 = vunpack.c.l.bf16 %v657
    %v668 = vunpack.c.h.bf16 %v657
    %v669 = vunpack.c.l.bf16 %v658
    %v670 = vunpack.c.h.bf16 %v658
    %v671 = vunpack.c.l.bf16 %v659
    %v672 = vunpack.c.h.bf16 %v659
    %v673 = vunpack.c.l.bf16 %v660
    %v674 = vunpack.c.h.bf16 %v660
    %v675 = vunpack.c.l.bf16 %v661
    %v676 = vunpack.c.h.bf16 %v661
    %v677 = vunpack.c.l.bf16 %v662
    %v678 = vunpack.c.h.bf16 %v662
    %v679 = vsub.f32 %v549, %v663
    %v680 = vsub.f32 %v556, %v664
    %v681 = vsub.f32 %v563, %v665
    %v682 = vsub.f32 %v570, %v666
    %v683 = vsub.f32 %v577, %v667
    %v684 = vsub.f32 %v584, %v668
    %v685 = vsub.f32 %v591, %v669
    %v686 = vsub.f32 %v598, %v670
    %v687 = vsub.f32 %v605, %v671
    %v688 = vsub.f32 %v612, %v672
    %v689 = vsub.f32 %v619, %v673
    %v690 = vsub.f32 %v626, %v674
    %v691 = vsub.f32 %v633, %v675
    %v692 = vsub.f32 %v640, %v676
    %v693 = vsub.f32 %v647, %v677
    %v694 = vsub.f32 %v654, %v678
    %v695 = vpack.c.bf16 %v680, %v679
    %v696 = vpack.c.bf16 %v682, %v681
    %v697 = vpack.c.bf16 %v684, %v683
    %v698 = vpack.c.bf16 %v686, %v685
    %v699 = vpack.c.bf16 %v688, %v687
    %v700 = vpack.c.bf16 %v690, %v689
    %v701 = vpack.c.bf16 %v692, %v691
    %v702 = vpack.c.bf16 %v694, %v693
    %v703 = vld [vmem:[#allocation2] sm:$0xff]
    %v704 = vld [vmem:[#allocation2 + $0x8] sm:$0xff]
    %v705 = vld [vmem:[#allocation2 + $0x10] sm:$0xff]
    %v706 = vld [vmem:[#allocation2 + $0x18] sm:$0xff]
    %v707 = vld [vmem:[#allocation2 + $0x20] sm:$0xff]
    %v708 = vld [vmem:[#allocation2 + $0x28] sm:$0xff]
    %v709 = vld [vmem:[#allocation2 + $0x30] sm:$0xff]
    %v710 = vld [vmem:[#allocation2 + $0x38] sm:$0xff]
    %v711 = vld [vmem:[#allocation2 + $0x40] sm:$0xff]
    %v712 = vld [vmem:[#allocation2 + $0x48] sm:$0xff]
    %v713 = vld [vmem:[#allocation2 + $0x50] sm:$0xff]
    %v714 = vld [vmem:[#allocation2 + $0x58] sm:$0xff]
    %v715 = vld [vmem:[#allocation2 + $0x60] sm:$0xff]
    %v716 = vld [vmem:[#allocation2 + $0x68] sm:$0xff]
    %v717 = vld [vmem:[#allocation2 + $0x70] sm:$0xff]
    %v718 = vld [vmem:[#allocation2 + $0x78] sm:$0xff]
    %v719 = vld [vmem:[#allocation2 + $0x80] sm:$0xff]
    %v720 = vld [vmem:[#allocation2 + $0x88] sm:$0xff]
    %v721 = vld [vmem:[#allocation2 + $0x90] sm:$0xff]
    %v722 = vld [vmem:[#allocation2 + $0x98] sm:$0xff]
    %v723 = vld [vmem:[#allocation2 + $0xa0] sm:$0xff]
    %v724 = vld [vmem:[#allocation2 + $0xa8] sm:$0xff]
    %v725 = vld [vmem:[#allocation2 + $0xb0] sm:$0xff]
    %v726 = vld [vmem:[#allocation2 + $0xb8] sm:$0xff]
    %v727 = vld [vmem:[#allocation2 + $0xc0] sm:$0xff]
    %v728 = vld [vmem:[#allocation2 + $0xc8] sm:$0xff]
    %v729 = vld [vmem:[#allocation2 + $0xd0] sm:$0xff]
    %v730 = vld [vmem:[#allocation2 + $0xd8] sm:$0xff]
    %v731 = vld [vmem:[#allocation2 + $0xe0] sm:$0xff]
    %v732 = vld [vmem:[#allocation2 + $0xe8] sm:$0xff]
    %v733 = vld [vmem:[#allocation2 + $0xf0] sm:$0xff]
    %v734 = vld [vmem:[#allocation2 + $0xf8] sm:$0xff]
    %v735 = vld [vmem:[#allocation2 + $0x100] sm:$0xff]
    %v736 = vld [vmem:[#allocation2 + $0x108] sm:$0xff]
    %v737 = vld [vmem:[#allocation2 + $0x110] sm:$0xff]
    %v738 = vld [vmem:[#allocation2 + $0x118] sm:$0xff]
    %v739 = vld [vmem:[#allocation2 + $0x120] sm:$0xff]
    %v740 = vld [vmem:[#allocation2 + $0x128] sm:$0xff]
    %v741 = vld [vmem:[#allocation2 + $0x130] sm:$0xff]
    %v742 = vld [vmem:[#allocation2 + $0x138] sm:$0xff]
    %v743 = vld [vmem:[#allocation2 + $0x140] sm:$0xff]
    %v744 = vld [vmem:[#allocation2 + $0x148] sm:$0xff]
    %v745 = vld [vmem:[#allocation2 + $0x150] sm:$0xff]
    %v746 = vld [vmem:[#allocation2 + $0x158] sm:$0xff]
    %v747 = vld [vmem:[#allocation2 + $0x160] sm:$0xff]
    %v748 = vld [vmem:[#allocation2 + $0x168] sm:$0xff]
    %v749 = vld [vmem:[#allocation2 + $0x170] sm:$0xff]
    %v750 = vld [vmem:[#allocation2 + $0x178] sm:$0xff]
    %v751 = vld [vmem:[#allocation2 + $0x180] sm:$0xff]
    %v752 = vld [vmem:[#allocation2 + $0x188] sm:$0xff]
    %v753 = vld [vmem:[#allocation2 + $0x190] sm:$0xff]
    %v754 = vld [vmem:[#allocation2 + $0x198] sm:$0xff]
    %v755 = vld [vmem:[#allocation2 + $0x1a0] sm:$0xff]
    %v756 = vld [vmem:[#allocation2 + $0x1a8] sm:$0xff]
    %v757 = vld [vmem:[#allocation2 + $0x1b0] sm:$0xff]
    %v758 = vld [vmem:[#allocation2 + $0x1b8] sm:$0xff]
    %v759 = vld [vmem:[#allocation2 + $0x1c0] sm:$0xff]
    %v760 = vld [vmem:[#allocation2 + $0x1c8] sm:$0xff]
    %v761 = vld [vmem:[#allocation2 + $0x1d0] sm:$0xff]
    %v762 = vld [vmem:[#allocation2 + $0x1d8] sm:$0xff]
    %v763 = vld [vmem:[#allocation2 + $0x1e0] sm:$0xff]
    %v764 = vld [vmem:[#allocation2 + $0x1e8] sm:$0xff]
    %v765 = vld [vmem:[#allocation2 + $0x1f0] sm:$0xff]
    %v766 = vld [vmem:[#allocation2 + $0x1f8] sm:$0xff]
    %v831 = vunpack.c.l.b16 %v703
    %v832 = vunpack.c.h.b16 %v703
    %v833 = vunpack.c.l.b16 %v704
    %v834 = vunpack.c.h.b16 %v704
    %v835 = vunpack.c.l.b16 %v705
    %v836 = vunpack.c.h.b16 %v705
    %v837 = vunpack.c.l.b16 %v706
    %v838 = vunpack.c.h.b16 %v706
    %v839 = vunpack.c.l.b16 %v707
    %v840 = vunpack.c.h.b16 %v707
    %v841 = vunpack.c.l.b16 %v708
    %v842 = vunpack.c.h.b16 %v708
    %v843 = vunpack.c.l.b16 %v709
    %v844 = vunpack.c.h.b16 %v709
    %v845 = vunpack.c.l.b16 %v710
    %v846 = vunpack.c.h.b16 %v710
    %v847 = vunpack.c.l.b16 %v711
    %v848 = vunpack.c.h.b16 %v711
    %v849 = vunpack.c.l.b16 %v712
    %v850 = vunpack.c.h.b16 %v712
    %v851 = vunpack.c.l.b16 %v713
    %v852 = vunpack.c.h.b16 %v713
    %v853 = vunpack.c.l.b16 %v714
    %v854 = vunpack.c.h.b16 %v714
    %v855 = vunpack.c.l.b16 %v715
    %v856 = vunpack.c.h.b16 %v715
    %v857 = vunpack.c.l.b16 %v716
    %v858 = vunpack.c.h.b16 %v716
    %v859 = vunpack.c.l.b16 %v717
    %v860 = vunpack.c.h.b16 %v717
    %v861 = vunpack.c.l.b16 %v718
    %v862 = vunpack.c.h.b16 %v718
    %v863 = vunpack.c.l.b16 %v719
    %v864 = vunpack.c.h.b16 %v719
    %v865 = vunpack.c.l.b16 %v720
    %v866 = vunpack.c.h.b16 %v720
    %v867 = vunpack.c.l.b16 %v721
    %v868 = vunpack.c.h.b16 %v721
    %v869 = vunpack.c.l.b16 %v722
    %v870 = vunpack.c.h.b16 %v722
    %v871 = vunpack.c.l.b16 %v723
    %v872 = vunpack.c.h.b16 %v723
    %v873 = vunpack.c.l.b16 %v724
    %v874 = vunpack.c.h.b16 %v724
    %v875 = vunpack.c.l.b16 %v725
    %v876 = vunpack.c.h.b16 %v725
    %v877 = vunpack.c.l.b16 %v726
    %v878 = vunpack.c.h.b16 %v726
    %v879 = vunpack.c.l.b16 %v727
    %v880 = vunpack.c.h.b16 %v727
    %v881 = vunpack.c.l.b16 %v728
    %v882 = vunpack.c.h.b16 %v728
    %v883 = vunpack.c.l.b16 %v729
    %v884 = vunpack.c.h.b16 %v729
    %v885 = vunpack.c.l.b16 %v730
    %v886 = vunpack.c.h.b16 %v730
    %v887 = vunpack.c.l.b16 %v731
    %v888 = vunpack.c.h.b16 %v731
    %v889 = vunpack.c.l.b16 %v732
    %v890 = vunpack.c.h.b16 %v732
    %v891 = vunpack.c.l.b16 %v733
    %v892 = vunpack.c.h.b16 %v733
    %v893 = vunpack.c.l.b16 %v734
    %v894 = vunpack.c.h.b16 %v734
    %v895 = vunpack.c.l.b16 %v735
    %v896 = vunpack.c.h.b16 %v735
    %v897 = vunpack.c.l.b16 %v736
    %v898 = vunpack.c.h.b16 %v736
    %v899 = vunpack.c.l.b16 %v737
    %v900 = vunpack.c.h.b16 %v737
    %v901 = vunpack.c.l.b16 %v738
    %v902 = vunpack.c.h.b16 %v738
    %v903 = vunpack.c.l.b16 %v739
    %v904 = vunpack.c.h.b16 %v739
    %v905 = vunpack.c.l.b16 %v740
    %v906 = vunpack.c.h.b16 %v740
    %v907 = vunpack.c.l.b16 %v741
    %v908 = vunpack.c.h.b16 %v741
    %v909 = vunpack.c.l.b16 %v742
    %v910 = vunpack.c.h.b16 %v742
    %v911 = vunpack.c.l.b16 %v743
    %v912 = vunpack.c.h.b16 %v743
    %v913 = vunpack.c.l.b16 %v744
    %v914 = vunpack.c.h.b16 %v744
    %v915 = vunpack.c.l.b16 %v745
    %v916 = vunpack.c.h.b16 %v745
    %v917 = vunpack.c.l.b16 %v746
    %v918 = vunpack.c.h.b16 %v746
    %v919 = vunpack.c.l.b16 %v747
    %v920 = vunpack.c.h.b16 %v747
    %v921 = vunpack.c.l.b16 %v748
    %v922 = vunpack.c.h.b16 %v748
    %v923 = vunpack.c.l.b16 %v749
    %v924 = vunpack.c.h.b16 %v749
    %v925 = vunpack.c.l.b16 %v750
    %v926 = vunpack.c.h.b16 %v750
    %v927 = vunpack.c.l.b16 %v751
    %v928 = vunpack.c.h.b16 %v751
    %v929 = vunpack.c.l.b16 %v752
    %v930 = vunpack.c.h.b16 %v752
    %v931 = vunpack.c.l.b16 %v753
    %v932 = vunpack.c.h.b16 %v753
    %v933 = vunpack.c.l.b16 %v754
    %v934 = vunpack.c.h.b16 %v754
    %v935 = vunpack.c.l.b16 %v755
    %v936 = vunpack.c.h.b16 %v755
    %v937 = vunpack.c.l.b16 %v756
    %v938 = vunpack.c.h.b16 %v756
    %v939 = vunpack.c.l.b16 %v757
    %v940 = vunpack.c.h.b16 %v757
    %v941 = vunpack.c.l.b16 %v758
    %v942 = vunpack.c.h.b16 %v758
    %v943 = vunpack.c.l.b16 %v759
    %v944 = vunpack.c.h.b16 %v759
    %v945 = vunpack.c.l.b16 %v760
    %v946 = vunpack.c.h.b16 %v760
    %v947 = vunpack.c.l.b16 %v761
    %v948 = vunpack.c.h.b16 %v761
    %v949 = vunpack.c.l.b16 %v762
    %v950 = vunpack.c.h.b16 %v762
    %v951 = vunpack.c.l.b16 %v763
    %v952 = vunpack.c.h.b16 %v763
    %v953 = vunpack.c.l.b16 %v764
    %v954 = vunpack.c.h.b16 %v764
    %v955 = vunpack.c.l.b16 %v765
    %v956 = vunpack.c.h.b16 %v765
    %v957 = vunpack.c.l.b16 %v766
    %v958 = vunpack.c.h.b16 %v766
    %v959 = vpack.c.b16 %v835, %v831
    %v960 = vpack.c.b16 %v836, %v832
    %v961 = vpack.c.b16 %v837, %v833
    %v962 = vpack.c.b16 %v838, %v834
    %v963 = vpack.c.b16 %v843, %v839
    %v964 = vpack.c.b16 %v844, %v840
    %v965 = vpack.c.b16 %v845, %v841
    %v966 = vpack.c.b16 %v846, %v842
    %v967 = vpack.c.b16 %v851, %v847
    %v968 = vpack.c.b16 %v852, %v848
    %v969 = vpack.c.b16 %v853, %v849
    %v970 = vpack.c.b16 %v854, %v850
    %v971 = vpack.c.b16 %v859, %v855
    %v972 = vpack.c.b16 %v860, %v856
    %v973 = vpack.c.b16 %v861, %v857
    %v974 = vpack.c.b16 %v862, %v858
    %v975 = vpack.c.b16 %v867, %v863
    %v976 = vpack.c.b16 %v868, %v864
    %v977 = vpack.c.b16 %v869, %v865
    %v978 = vpack.c.b16 %v870, %v866
    %v979 = vpack.c.b16 %v875, %v871
    %v980 = vpack.c.b16 %v876, %v872
    %v981 = vpack.c.b16 %v877, %v873
    %v982 = vpack.c.b16 %v878, %v874
    %v983 = vpack.c.b16 %v883, %v879
    %v984 = vpack.c.b16 %v884, %v880
    %v985 = vpack.c.b16 %v885, %v881
    %v986 = vpack.c.b16 %v886, %v882
    %v987 = vpack.c.b16 %v891, %v887
    %v988 = vpack.c.b16 %v892, %v888
    %v989 = vpack.c.b16 %v893, %v889
    %v990 = vpack.c.b16 %v894, %v890
    %v991 = vpack.c.b16 %v899, %v895
    %v992 = vpack.c.b16 %v900, %v896
    %v993 = vpack.c.b16 %v901, %v897
    %v994 = vpack.c.b16 %v902, %v898
    %v995 = vpack.c.b16 %v907, %v903
    %v996 = vpack.c.b16 %v908, %v904
    %v997 = vpack.c.b16 %v909, %v905
    %v998 = vpack.c.b16 %v910, %v906
    %v999 = vpack.c.b16 %v915, %v911
    %v1000 = vpack.c.b16 %v916, %v912
    %v1001 = vpack.c.b16 %v917, %v913
    %v1002 = vpack.c.b16 %v918, %v914
    %v1003 = vpack.c.b16 %v923, %v919
    %v1004 = vpack.c.b16 %v924, %v920
    %v1005 = vpack.c.b16 %v925, %v921
    %v1006 = vpack.c.b16 %v926, %v922
    %v1007 = vpack.c.b16 %v931, %v927
    %v1008 = vpack.c.b16 %v932, %v928
    %v1009 = vpack.c.b16 %v933, %v929
    %v1010 = vpack.c.b16 %v934, %v930
    %v1011 = vpack.c.b16 %v939, %v935
    %v1012 = vpack.c.b16 %v940, %v936
    %v1013 = vpack.c.b16 %v941, %v937
    %v1014 = vpack.c.b16 %v942, %v938
    %v1015 = vpack.c.b16 %v947, %v943
    %v1016 = vpack.c.b16 %v948, %v944
    %v1017 = vpack.c.b16 %v949, %v945
    %v1018 = vpack.c.b16 %v950, %v946
    %v1019 = vpack.c.b16 %v955, %v951
    %v1020 = vpack.c.b16 %v956, %v952
    %v1021 = vpack.c.b16 %v957, %v953
    %v1022 = vpack.c.b16 %v958, %v954
    %1087 = vmatprep.subr.bf16.mxu0 %v960
    %1088 = vmatpush1.bf16.msra.mxu0 %v959
    %1089 = vmatprep.subr.bf16.mxu0 %v964
    %1090 = vmatpush1.bf16.msra.mxu0 %v963
    %1091 = vmatprep.subr.bf16.mxu0 %v968
    %1092 = vmatpush1.bf16.msra.mxu0 %v967
    %1093 = vmatprep.subr.bf16.mxu0 %v972
    %1094 = vmatpush1.bf16.msra.mxu0 %v971
    %1095 = vmatprep.subr.bf16.mxu0 %v976
    %1096 = vmatpush1.bf16.msra.mxu0 %v975
    %1097 = vmatprep.subr.bf16.mxu0 %v980
    %1098 = vmatpush1.bf16.msra.mxu0 %v979
    %1099 = vmatprep.subr.bf16.mxu0 %v984
    %1100 = vmatpush1.bf16.msra.mxu0 %v983
    %1101 = vmatprep.subr.bf16.mxu0 %v988
    %1102 = vmatpush1.bf16.msra.mxu0 %v987
    %1103 = vmatprep.subr.bf16.mxu0 %v992
    %1104 = vmatpush1.bf16.msra.mxu0 %v991
    %1105 = vmatprep.subr.bf16.mxu0 %v996
    %1106 = vmatpush1.bf16.msra.mxu0 %v995
    %1107 = vmatprep.subr.bf16.mxu0 %v1000
    %1108 = vmatpush1.bf16.msra.mxu0 %v999
    %1109 = vmatprep.subr.bf16.mxu0 %v1004
    %1110 = vmatpush1.bf16.msra.mxu0 %v1003
    %1111 = vmatprep.subr.bf16.mxu0 %v1008
    %1112 = vmatpush1.bf16.msra.mxu0 %v1007
    %1113 = vmatprep.subr.bf16.mxu0 %v1012
    %1114 = vmatpush1.bf16.msra.mxu0 %v1011
    %1115 = vmatprep.subr.bf16.mxu0 %v1016
    %1116 = vmatpush1.bf16.msra.mxu0 %v1015
    %1117 = vmatprep.subr.bf16.mxu0 %v1020
    %1118 = vmatpush1.bf16.msra.mxu0 %v1019
    %1119 = vmatprep.mubr.bf16.mxu0 %v695
    %1120 = vmatmul.mubr.bf16.gmra.mrb[0].mxu0 %v655
    %v1121 = vpop.f32.mrb[0].mxu0
    %v1122 = vadd.f32 0.0, %v1121
    %v1123 = vpop.f32.mrb[0].mxu0
    %v1124 = vadd.f32 0.0, %v1123
    %v1125 = vpop.f32.mrb[0].mxu0
    %v1126 = vadd.f32 0.0, %v1125
    %v1127 = vpop.f32.mrb[0].mxu0
    %v1128 = vadd.f32 0.0, %v1127
    %1129 = vmatprep.mubr.bf16.mxu0 %v696
    %1130 = vmatmul.mubr.bf16.gmra.mrb[0].mxu0 %v656
    %v1131 = vpop.f32.mrb[0].mxu0
    %v1132 = vadd.f32 0.0, %v1131
    %v1133 = vpop.f32.mrb[0].mxu0
    %v1134 = vadd.f32 0.0, %v1133
    %v1135 = vpop.f32.mrb[0].mxu0
    %v1136 = vadd.f32 0.0, %v1135
    %v1137 = vpop.f32.mrb[0].mxu0
    %v1138 = vadd.f32 0.0, %v1137
    %1139 = vmatprep.mubr.bf16.mxu0 %v697
    %1140 = vmatmul.mubr.bf16.gmra.mrb[0].mxu0 %v657
    %v1141 = vpop.f32.mrb[0].mxu0
    %v1142 = vadd.f32 0.0, %v1141
    %v1143 = vpop.f32.mrb[0].mxu0
    %v1144 = vadd.f32 0.0, %v1143
    %v1145 = vpop.f32.mrb[0].mxu0
    %v1146 = vadd.f32 0.0, %v1145
    %v1147 = vpop.f32.mrb[0].mxu0
    %v1148 = vadd.f32 0.0, %v1147
    %1149 = vmatprep.mubr.bf16.mxu0 %v698
    %1150 = vmatmul.mubr.bf16.gmra.mrb[0].mxu0 %v658
    %v1151 = vpop.f32.mrb[0].mxu0
    %v1152 = vadd.f32 0.0, %v1151
    %v1153 = vpop.f32.mrb[0].mxu0
    %v1154 = vadd.f32 0.0, %v1153
    %v1155 = vpop.f32.mrb[0].mxu0
    %v1156 = vadd.f32 0.0, %v1155
    %v1157 = vpop.f32.mrb[0].mxu0
    %v1158 = vadd.f32 0.0, %v1157
    %1159 = vmatprep.mubr.bf16.mxu0 %v699
    %1160 = vmatmul.mubr.bf16.gmra.mrb[0].mxu0 %v659
    %v1161 = vpop.f32.mrb[0].mxu0
    %v1162 = vadd.f32 0.0, %v1161
    %v1163 = vpop.f32.mrb[0].mxu0
    %v1164 = vadd.f32 0.0, %v1163
    %v1165 = vpop.f32.mrb[0].mxu0
    %v1166 = vadd.f32 0.0, %v1165
    %v1167 = vpop.f32.mrb[0].mxu0
    %v1168 = vadd.f32 0.0, %v1167
    %1169 = vmatprep.mubr.bf16.mxu0 %v700
    %1170 = vmatmul.mubr.bf16.gmra.mrb[0].mxu0 %v660
    %v1171 = vpop.f32.mrb[0].mxu0
    %v1172 = vadd.f32 0.0, %v1171
    %v1173 = vpop.f32.mrb[0].mxu0
    %v1174 = vadd.f32 0.0, %v1173
    %v1175 = vpop.f32.mrb[0].mxu0
    %v1176 = vadd.f32 0.0, %v1175
    %v1177 = vpop.f32.mrb[0].mxu0
    %v1178 = vadd.f32 0.0, %v1177
    %1179 = vmatprep.mubr.bf16.mxu0 %v701
    %1180 = vmatmul.mubr.bf16.gmra.mrb[0].mxu0 %v661
    %v1181 = vpop.f32.mrb[0].mxu0
    %v1182 = vadd.f32 0.0, %v1181
    %v1183 = vpop.f32.mrb[0].mxu0
    %v1184 = vadd.f32 0.0, %v1183
    %v1185 = vpop.f32.mrb[0].mxu0
    %v1186 = vadd.f32 0.0, %v1185
    %v1187 = vpop.f32.mrb[0].mxu0
    %v1188 = vadd.f32 0.0, %v1187
    %1189 = vmatprep.mubr.bf16.mxu0 %v702
    %1190 = vmatmul.mubr.bf16.gmra.mrb[0].mxu0 %v662
    %v1191 = vpop.f32.mrb[0].mxu0
    %v1192 = vadd.f32 0.0, %v1191
    %v1193 = vpop.f32.mrb[0].mxu0
    %v1194 = vadd.f32 0.0, %v1193
    %v1195 = vpop.f32.mrb[0].mxu0
    %v1196 = vadd.f32 0.0, %v1195
    %v1197 = vpop.f32.mrb[0].mxu0
    %v1198 = vadd.f32 0.0, %v1197
    %1199 = vdwg.mxu0
    %1200 = vmatprep.subr.bf16.mxu0 %v962
    %1201 = vmatpush1.bf16.msra.mxu0 %v961
    %1202 = vmatprep.subr.bf16.mxu0 %v966
    %1203 = vmatpush1.bf16.msra.mxu0 %v965
    %1204 = vmatprep.subr.bf16.mxu0 %v970
    %1205 = vmatpush1.bf16.msra.mxu0 %v969
    %1206 = vmatprep.subr.bf16.mxu0 %v974
    %1207 = vmatpush1.bf16.msra.mxu0 %v973
    %1208 = vmatprep.subr.bf16.mxu0 %v978
    %1209 = vmatpush1.bf16.msra.mxu0 %v977
    %1210 = vmatprep.subr.bf16.mxu0 %v982
    %1211 = vmatpush1.bf16.msra.mxu0 %v981
    %1212 = vmatprep.subr.bf16.mxu0 %v986
    %1213 = vmatpush1.bf16.msra.mxu0 %v985
    %1214 = vmatprep.subr.bf16.mxu0 %v990
    %1215 = vmatpush1.bf16.msra.mxu0 %v989
    %1216 = vmatprep.subr.bf16.mxu0 %v994
    %1217 = vmatpush1.bf16.msra.mxu0 %v993
    %1218 = vmatprep.subr.bf16.mxu0 %v998
    %1219 = vmatpush1.bf16.msra.mxu0 %v997
    %1220 = vmatprep.subr.bf16.mxu0 %v1002
    %1221 = vmatpush1.bf16.msra.mxu0 %v1001
    %1222 = vmatprep.subr.bf16.mxu0 %v1006
    %1223 = vmatpush1.bf16.msra.mxu0 %v1005
    %1224 = vmatprep.subr.bf16.mxu0 %v1010
    %1225 = vmatpush1.bf16.msra.mxu0 %v1009
    %1226 = vmatprep.subr.bf16.mxu0 %v1014
    %1227 = vmatpush1.bf16.msra.mxu0 %v1013
    %1228 = vmatprep.subr.bf16.mxu0 %v1018
    %1229 = vmatpush1.bf16.msra.mxu0 %v1017
    %1230 = vmatprep.subr.bf16.mxu0 %v1022
    %1231 = vmatpush1.bf16.msra.mxu0 %v1021
    %1232 = vmatprep.mubr.bf16.mxu0 %v695
    %1233 = vmatmul.mubr.bf16.gmra.mrb[0].mxu0 %v655
    %v1234 = vpop.f32.mrb[0].mxu0
    %v1235 = vadd.f32 0.0, %v1234
    %v1236 = vpop.f32.mrb[0].mxu0
    %v1237 = vadd.f32 0.0, %v1236
    %v1238 = vpop.f32.mrb[0].mxu0
    %v1239 = vadd.f32 0.0, %v1238
    %v1240 = vpop.f32.mrb[0].mxu0
    %v1241 = vadd.f32 0.0, %v1240
    %1242 = vmatprep.mubr.bf16.mxu0 %v696
    %1243 = vmatmul.mubr.bf16.gmra.mrb[0].mxu0 %v656
    %v1244 = vpop.f32.mrb[0].mxu0
    %v1245 = vadd.f32 0.0, %v1244
    %v1246 = vpop.f32.mrb[0].mxu0
    %v1247 = vadd.f32 0.0, %v1246
    %v1248 = vpop.f32.mrb[0].mxu0
    %v1249 = vadd.f32 0.0, %v1248
    %v1250 = vpop.f32.mrb[0].mxu0
    %v1251 = vadd.f32 0.0, %v1250
    %1252 = vmatprep.mubr.bf16.mxu0 %v697
    %1253 = vmatmul.mubr.bf16.gmra.mrb[0].mxu0 %v657
    %v1254 = vpop.f32.mrb[0].mxu0
    %v1255 = vadd.f32 0.0, %v1254
    %v1256 = vpop.f32.mrb[0].mxu0
    %v1257 = vadd.f32 0.0, %v1256
    %v1258 = vpop.f32.mrb[0].mxu0
    %v1259 = vadd.f32 0.0, %v1258
    %v1260 = vpop.f32.mrb[0].mxu0
    %v1261 = vadd.f32 0.0, %v1260
    %1262 = vmatprep.mubr.bf16.mxu0 %v698
    %1263 = vmatmul.mubr.bf16.gmra.mrb[0].mxu0 %v658
    %v1264 = vpop.f32.mrb[0].mxu0
    %v1265 = vadd.f32 0.0, %v1264
    %v1266 = vpop.f32.mrb[0].mxu0
    %v1267 = vadd.f32 0.0, %v1266
    %v1268 = vpop.f32.mrb[0].mxu0
    %v1269 = vadd.f32 0.0, %v1268
    %v1270 = vpop.f32.mrb[0].mxu0
    %v1271 = vadd.f32 0.0, %v1270
    %1272 = vmatprep.mubr.bf16.mxu0 %v699
    %1273 = vmatmul.mubr.bf16.gmra.mrb[0].mxu0 %v659
    %v1274 = vpop.f32.mrb[0].mxu0
    %v1275 = vadd.f32 0.0, %v1274
    %v1276 = vpop.f32.mrb[0].mxu0
    %v1277 = vadd.f32 0.0, %v1276
    %v1278 = vpop.f32.mrb[0].mxu0
    %v1279 = vadd.f32 0.0, %v1278
    %v1280 = vpop.f32.mrb[0].mxu0
    %v1281 = vadd.f32 0.0, %v1280
    %1282 = vmatprep.mubr.bf16.mxu0 %v700
    %1283 = vmatmul.mubr.bf16.gmra.mrb[0].mxu0 %v660
    %v1284 = vpop.f32.mrb[0].mxu0
    %v1285 = vadd.f32 0.0, %v1284
    %v1286 = vpop.f32.mrb[0].mxu0
    %v1287 = vadd.f32 0.0, %v1286
    %v1288 = vpop.f32.mrb[0].mxu0
    %v1289 = vadd.f32 0.0, %v1288
    %v1290 = vpop.f32.mrb[0].mxu0
    %v1291 = vadd.f32 0.0, %v1290
    %1292 = vmatprep.mubr.bf16.mxu0 %v701
    %1293 = vmatmul.mubr.bf16.gmra.mrb[0].mxu0 %v661
    %v1294 = vpop.f32.mrb[0].mxu0
    %v1295 = vadd.f32 0.0, %v1294
    %v1296 = vpop.f32.mrb[0].mxu0
    %v1297 = vadd.f32 0.0, %v1296
    %v1298 = vpop.f32.mrb[0].mxu0
    %v1299 = vadd.f32 0.0, %v1298
    %v1300 = vpop.f32.mrb[0].mxu0
    %v1301 = vadd.f32 0.0, %v1300
    %1302 = vmatprep.mubr.bf16.mxu0 %v702
    %1303 = vmatmul.mubr.bf16.gmra.mrb[0].mxu0 %v662
    %v1304 = vpop.f32.mrb[0].mxu0
    %v1305 = vadd.f32 0.0, %v1304
    %v1306 = vpop.f32.mrb[0].mxu0
    %v1307 = vadd.f32 0.0, %v1306
    %v1308 = vpop.f32.mrb[0].mxu0
    %v1309 = vadd.f32 0.0, %v1308
    %v1310 = vpop.f32.mrb[0].mxu0
    %v1311 = vadd.f32 0.0, %v1310
    %1312 = vdwg.mxu0
    %v1314 = vlaneseq
    %v1315 = vshrl.u32 %v1314, 7
    %v1316 = vsub.s32 0, %v1315
    %v1317 = vrot.slane %v88, %v1316
    %v1318 = vlaneseq
    %v1319 = vshrl.u32 %v1318, 7
    %v1320 = vsub.s32 1, %v1319
    %v1321 = vrot.slane %v88, %v1320
    %v1322 = vlaneseq
    %v1323 = vshrl.u32 %v1322, 7
    %v1324 = vsub.s32 2, %v1323
    %v1325 = vrot.slane %v88, %v1324
    %v1326 = vlaneseq
    %v1327 = vshrl.u32 %v1326, 7
    %v1328 = vsub.s32 3, %v1327
    %v1329 = vrot.slane %v88, %v1328
    %v1334 = vsub.f32 %v1122, %v1317
    %v1335 = vsub.f32 %v1124, %v1321
    %v1336 = vsub.f32 %v1235, %v1325
    %v1337 = vsub.f32 %v1237, %v1329
    %v1338 = vsub.f32 %v1126, %v1317
    %v1339 = vsub.f32 %v1128, %v1321
    %v1340 = vsub.f32 %v1239, %v1325
    %v1341 = vsub.f32 %v1241, %v1329
    %v1342 = vsub.f32 %v1132, %v1317
    %v1343 = vsub.f32 %v1134, %v1321
    %v1344 = vsub.f32 %v1245, %v1325
    %v1345 = vsub.f32 %v1247, %v1329
    %v1346 = vsub.f32 %v1136, %v1317
    %v1347 = vsub.f32 %v1138, %v1321
    %v1348 = vsub.f32 %v1249, %v1325
    %v1349 = vsub.f32 %v1251, %v1329
    %v1350 = vsub.f32 %v1142, %v1317
    %v1351 = vsub.f32 %v1144, %v1321
    %v1352 = vsub.f32 %v1255, %v1325
    %v1353 = vsub.f32 %v1257, %v1329
    %v1354 = vsub.f32 %v1146, %v1317
    %v1355 = vsub.f32 %v1148, %v1321
    %v1356 = vsub.f32 %v1259, %v1325
    %v1357 = vsub.f32 %v1261, %v1329
    %v1358 = vsub.f32 %v1152, %v1317
    %v1359 = vsub.f32 %v1154, %v1321
    %v1360 = vsub.f32 %v1265, %v1325
    %v1361 = vsub.f32 %v1267, %v1329
    %v1362 = vsub.f32 %v1156, %v1317
    %v1363 = vsub.f32 %v1158, %v1321
    %v1364 = vsub.f32 %v1269, %v1325
    %v1365 = vsub.f32 %v1271, %v1329
    %v1366 = vsub.f32 %v1162, %v1317
    %v1367 = vsub.f32 %v1164, %v1321
    %v1368 = vsub.f32 %v1275, %v1325
    %v1369 = vsub.f32 %v1277, %v1329
    %v1370 = vsub.f32 %v1166, %v1317
    %v1371 = vsub.f32 %v1168, %v1321
    %v1372 = vsub.f32 %v1279, %v1325
    %v1373 = vsub.f32 %v1281, %v1329
    %v1374 = vsub.f32 %v1172, %v1317
    %v1375 = vsub.f32 %v1174, %v1321
    %v1376 = vsub.f32 %v1285, %v1325
    %v1377 = vsub.f32 %v1287, %v1329
    %v1378 = vsub.f32 %v1176, %v1317
    %v1379 = vsub.f32 %v1178, %v1321
    %v1380 = vsub.f32 %v1289, %v1325
    %v1381 = vsub.f32 %v1291, %v1329
    %v1382 = vsub.f32 %v1182, %v1317
    %v1383 = vsub.f32 %v1184, %v1321
    %v1384 = vsub.f32 %v1295, %v1325
    %v1385 = vsub.f32 %v1297, %v1329
    %v1386 = vsub.f32 %v1186, %v1317
    %v1387 = vsub.f32 %v1188, %v1321
    %v1388 = vsub.f32 %v1299, %v1325
    %v1389 = vsub.f32 %v1301, %v1329
    %v1390 = vsub.f32 %v1192, %v1317
    %v1391 = vsub.f32 %v1194, %v1321
    %v1392 = vsub.f32 %v1305, %v1325
    %v1393 = vsub.f32 %v1307, %v1329
    %v1394 = vsub.f32 %v1196, %v1317
    %v1395 = vsub.f32 %v1198, %v1321
    %v1396 = vsub.f32 %v1309, %v1325
    %v1397 = vsub.f32 %v1311, %v1329
    %v1398 = vmul.f32 %v1334, 0.8
    %v1399 = vmul.f32 %v1335, 0.8
    %v1400 = vmul.f32 %v1336, 0.8
    %v1401 = vmul.f32 %v1337, 0.8
    %v1402 = vmul.f32 %v1338, 0.8
    %v1403 = vmul.f32 %v1339, 0.8
    %v1404 = vmul.f32 %v1340, 0.8
    %v1405 = vmul.f32 %v1341, 0.8
    %v1406 = vmul.f32 %v1342, 0.8
    %v1407 = vmul.f32 %v1343, 0.8
    %v1408 = vmul.f32 %v1344, 0.8
    %v1409 = vmul.f32 %v1345, 0.8
    %v1410 = vmul.f32 %v1346, 0.8
    %v1411 = vmul.f32 %v1347, 0.8
    %v1412 = vmul.f32 %v1348, 0.8
    %v1413 = vmul.f32 %v1349, 0.8
    %v1414 = vmul.f32 %v1350, 0.8
    %v1415 = vmul.f32 %v1351, 0.8
    %v1416 = vmul.f32 %v1352, 0.8
    %v1417 = vmul.f32 %v1353, 0.8
    %v1418 = vmul.f32 %v1354, 0.8
    %v1419 = vmul.f32 %v1355, 0.8
    %v1420 = vmul.f32 %v1356, 0.8
    %v1421 = vmul.f32 %v1357, 0.8
    %v1422 = vmul.f32 %v1358, 0.8
    %v1423 = vmul.f32 %v1359, 0.8
    %v1424 = vmul.f32 %v1360, 0.8
    %v1425 = vmul.f32 %v1361, 0.8
    %v1426 = vmul.f32 %v1362, 0.8
    %v1427 = vmul.f32 %v1363, 0.8
    %v1428 = vmul.f32 %v1364, 0.8
    %v1429 = vmul.f32 %v1365, 0.8
    %v1430 = vmul.f32 %v1366, 0.8
    %v1431 = vmul.f32 %v1367, 0.8
    %v1432 = vmul.f32 %v1368, 0.8
    %v1433 = vmul.f32 %v1369, 0.8
    %v1434 = vmul.f32 %v1370, 0.8
    %v1435 = vmul.f32 %v1371, 0.8
    %v1436 = vmul.f32 %v1372, 0.8
    %v1437 = vmul.f32 %v1373, 0.8
    %v1438 = vmul.f32 %v1374, 0.8
    %v1439 = vmul.f32 %v1375, 0.8
    %v1440 = vmul.f32 %v1376, 0.8
    %v1441 = vmul.f32 %v1377, 0.8
    %v1442 = vmul.f32 %v1378, 0.8
    %v1443 = vmul.f32 %v1379, 0.8
    %v1444 = vmul.f32 %v1380, 0.8
    %v1445 = vmul.f32 %v1381, 0.8
    %v1446 = vmul.f32 %v1382, 0.8
    %v1447 = vmul.f32 %v1383, 0.8
    %v1448 = vmul.f32 %v1384, 0.8
    %v1449 = vmul.f32 %v1385, 0.8
    %v1450 = vmul.f32 %v1386, 0.8
    %v1451 = vmul.f32 %v1387, 0.8
    %v1452 = vmul.f32 %v1388, 0.8
    %v1453 = vmul.f32 %v1389, 0.8
    %v1454 = vmul.f32 %v1390, 0.8
    %v1455 = vmul.f32 %v1391, 0.8
    %v1456 = vmul.f32 %v1392, 0.8
    %v1457 = vmul.f32 %v1393, 0.8
    %v1458 = vmul.f32 %v1394, 0.8
    %v1459 = vmul.f32 %v1395, 0.8
    %v1460 = vmul.f32 %v1396, 0.8
    %v1461 = vmul.f32 %v1397, 0.8
    %v1462 = vmul.f32 %v1398, %v1398
    %v1463 = vmul.f32 %v1399, %v1399
    %v1464 = vmul.f32 %v1400, %v1400
    %v1465 = vmul.f32 %v1401, %v1401
    %v1466 = vmul.f32 %v1402, %v1402
    %v1467 = vmul.f32 %v1403, %v1403
    %v1468 = vmul.f32 %v1404, %v1404
    %v1469 = vmul.f32 %v1405, %v1405
    %v1470 = vmul.f32 %v1406, %v1406
    %v1471 = vmul.f32 %v1407, %v1407
    %v1472 = vmul.f32 %v1408, %v1408
    %v1473 = vmul.f32 %v1409, %v1409
    %v1474 = vmul.f32 %v1410, %v1410
    %v1475 = vmul.f32 %v1411, %v1411
    %v1476 = vmul.f32 %v1412, %v1412
    %v1477 = vmul.f32 %v1413, %v1413
    %v1478 = vmul.f32 %v1414, %v1414
    %v1479 = vmul.f32 %v1415, %v1415
    %v1480 = vmul.f32 %v1416, %v1416
    %v1481 = vmul.f32 %v1417, %v1417
    %v1482 = vmul.f32 %v1418, %v1418
    %v1483 = vmul.f32 %v1419, %v1419
    %v1484 = vmul.f32 %v1420, %v1420
    %v1485 = vmul.f32 %v1421, %v1421
    %v1486 = vmul.f32 %v1422, %v1422
    %v1487 = vmul.f32 %v1423, %v1423
    %v1488 = vmul.f32 %v1424, %v1424
    %v1489 = vmul.f32 %v1425, %v1425
    %v1490 = vmul.f32 %v1426, %v1426
    %v1491 = vmul.f32 %v1427, %v1427
    %v1492 = vmul.f32 %v1428, %v1428
    %v1493 = vmul.f32 %v1429, %v1429
    %v1494 = vmul.f32 %v1430, %v1430
    %v1495 = vmul.f32 %v1431, %v1431
    %v1496 = vmul.f32 %v1432, %v1432
    %v1497 = vmul.f32 %v1433, %v1433
    %v1498 = vmul.f32 %v1434, %v1434
    %v1499 = vmul.f32 %v1435, %v1435
    %v1500 = vmul.f32 %v1436, %v1436
    %v1501 = vmul.f32 %v1437, %v1437
    %v1502 = vmul.f32 %v1438, %v1438
    %v1503 = vmul.f32 %v1439, %v1439
    %v1504 = vmul.f32 %v1440, %v1440
    %v1505 = vmul.f32 %v1441, %v1441
    %v1506 = vmul.f32 %v1442, %v1442
    %v1507 = vmul.f32 %v1443, %v1443
    %v1508 = vmul.f32 %v1444, %v1444
    %v1509 = vmul.f32 %v1445, %v1445
    %v1510 = vmul.f32 %v1446, %v1446
    %v1511 = vmul.f32 %v1447, %v1447
    %v1512 = vmul.f32 %v1448, %v1448
    %v1513 = vmul.f32 %v1449, %v1449
    %v1514 = vmul.f32 %v1450, %v1450
    %v1515 = vmul.f32 %v1451, %v1451
    %v1516 = vmul.f32 %v1452, %v1452
    %v1517 = vmul.f32 %v1453, %v1453
    %v1518 = vmul.f32 %v1454, %v1454
    %v1519 = vmul.f32 %v1455, %v1455
    %v1520 = vmul.f32 %v1456, %v1456
    %v1521 = vmul.f32 %v1457, %v1457
    %v1522 = vmul.f32 %v1458, %v1458
    %v1523 = vmul.f32 %v1459, %v1459
    %v1524 = vmul.f32 %v1460, %v1460
    %v1525 = vmul.f32 %v1461, %v1461
    %v1526 = vsub.f32 0.0, %v1462
    %v1527 = vsub.f32 0.0, %v1463
    %v1528 = vsub.f32 0.0, %v1464
    %v1529 = vsub.f32 0.0, %v1465
    %v1530 = vsub.f32 0.0, %v1466
    %v1531 = vsub.f32 0.0, %v1467
    %v1532 = vsub.f32 0.0, %v1468
    %v1533 = vsub.f32 0.0, %v1469
    %v1534 = vsub.f32 0.0, %v1470
    %v1535 = vsub.f32 0.0, %v1471
    %v1536 = vsub.f32 0.0, %v1472
    %v1537 = vsub.f32 0.0, %v1473
    %v1538 = vsub.f32 0.0, %v1474
    %v1539 = vsub.f32 0.0, %v1475
    %v1540 = vsub.f32 0.0, %v1476
    %v1541 = vsub.f32 0.0, %v1477
    %v1542 = vsub.f32 0.0, %v1478
    %v1543 = vsub.f32 0.0, %v1479
    %v1544 = vsub.f32 0.0, %v1480
    %v1545 = vsub.f32 0.0, %v1481
    %v1546 = vsub.f32 0.0, %v1482
    %v1547 = vsub.f32 0.0, %v1483
    %v1548 = vsub.f32 0.0, %v1484
    %v1549 = vsub.f32 0.0, %v1485
    %v1550 = vsub.f32 0.0, %v1486
    %v1551 = vsub.f32 0.0, %v1487
    %v1552 = vsub.f32 0.0, %v1488
    %v1553 = vsub.f32 0.0, %v1489
    %v1554 = vsub.f32 0.0, %v1490
    %v1555 = vsub.f32 0.0, %v1491
    %v1556 = vsub.f32 0.0, %v1492
    %v1557 = vsub.f32 0.0, %v1493
    %v1558 = vsub.f32 0.0, %v1494
    %v1559 = vsub.f32 0.0, %v1495
    %v1560 = vsub.f32 0.0, %v1496
    %v1561 = vsub.f32 0.0, %v1497
    %v1562 = vsub.f32 0.0, %v1498
    %v1563 = vsub.f32 0.0, %v1499
    %v1564 = vsub.f32 0.0, %v1500
    %v1565 = vsub.f32 0.0, %v1501
    %v1566 = vsub.f32 0.0, %v1502
    %v1567 = vsub.f32 0.0, %v1503
    %v1568 = vsub.f32 0.0, %v1504
    %v1569 = vsub.f32 0.0, %v1505
    %v1570 = vsub.f32 0.0, %v1506
    %v1571 = vsub.f32 0.0, %v1507
    %v1572 = vsub.f32 0.0, %v1508
    %v1573 = vsub.f32 0.0, %v1509
    %v1574 = vsub.f32 0.0, %v1510
    %v1575 = vsub.f32 0.0, %v1511
    %v1576 = vsub.f32 0.0, %v1512
    %v1577 = vsub.f32 0.0, %v1513
    %v1578 = vsub.f32 0.0, %v1514
    %v1579 = vsub.f32 0.0, %v1515
    %v1580 = vsub.f32 0.0, %v1516
    %v1581 = vsub.f32 0.0, %v1517
    %v1582 = vsub.f32 0.0, %v1518
    %v1583 = vsub.f32 0.0, %v1519
    %v1584 = vsub.f32 0.0, %v1520
    %v1585 = vsub.f32 0.0, %v1521
    %v1586 = vsub.f32 0.0, %v1522
    %v1587 = vsub.f32 0.0, %v1523
    %v1588 = vsub.f32 0.0, %v1524
    %v1589 = vsub.f32 0.0, %v1525
    %v1590 = vmul.f32 %v1526, 1.442695
    %v1591 = vpow.pop %v1590
    %v1592 = vmul.f32 %v1527, 1.442695
    %v1593 = vpow.pop %v1592
    %v1594 = vmul.f32 %v1528, 1.442695
    %v1595 = vpow.pop %v1594
    %v1596 = vmul.f32 %v1529, 1.442695
    %v1597 = vpow.pop %v1596
    %v1598 = vmul.f32 %v1530, 1.442695
    %v1599 = vpow.pop %v1598
    %v1600 = vmul.f32 %v1531, 1.442695
    %v1601 = vpow.pop %v1600
    %v1602 = vmul.f32 %v1532, 1.442695
    %v1603 = vpow.pop %v1602
    %v1604 = vmul.f32 %v1533, 1.442695
    %v1605 = vpow.pop %v1604
    %v1606 = vmul.f32 %v1534, 1.442695
    %v1607 = vpow.pop %v1606
    %v1608 = vmul.f32 %v1535, 1.442695
    %v1609 = vpow.pop %v1608
    %v1610 = vmul.f32 %v1536, 1.442695
    %v1611 = vpow.pop %v1610
    %v1612 = vmul.f32 %v1537, 1.442695
    %v1613 = vpow.pop %v1612
    %v1614 = vmul.f32 %v1538, 1.442695
    %v1615 = vpow.pop %v1614
    %v1616 = vmul.f32 %v1539, 1.442695
    %v1617 = vpow.pop %v1616
    %v1618 = vmul.f32 %v1540, 1.442695
    %v1619 = vpow.pop %v1618
    %v1620 = vmul.f32 %v1541, 1.442695
    %v1621 = vpow.pop %v1620
    %v1622 = vmul.f32 %v1542, 1.442695
    %v1623 = vpow.pop %v1622
    %v1624 = vmul.f32 %v1543, 1.442695
    %v1625 = vpow.pop %v1624
    %v1626 = vmul.f32 %v1544, 1.442695
    %v1627 = vpow.pop %v1626
    %v1628 = vmul.f32 %v1545, 1.442695
    %v1629 = vpow.pop %v1628
    %v1630 = vmul.f32 %v1546, 1.442695
    %v1631 = vpow.pop %v1630
    %v1632 = vmul.f32 %v1547, 1.442695
    %v1633 = vpow.pop %v1632
    %v1634 = vmul.f32 %v1548, 1.442695
    %v1635 = vpow.pop %v1634
    %v1636 = vmul.f32 %v1549, 1.442695
    %v1637 = vpow.pop %v1636
    %v1638 = vmul.f32 %v1550, 1.442695
    %v1639 = vpow.pop %v1638
    %v1640 = vmul.f32 %v1551, 1.442695
    %v1641 = vpow.pop %v1640
    %v1642 = vmul.f32 %v1552, 1.442695
    %v1643 = vpow.pop %v1642
    %v1644 = vmul.f32 %v1553, 1.442695
    %v1645 = vpow.pop %v1644
    %v1646 = vmul.f32 %v1554, 1.442695
    %v1647 = vpow.pop %v1646
    %v1648 = vmul.f32 %v1555, 1.442695
    %v1649 = vpow.pop %v1648
    %v1650 = vmul.f32 %v1556, 1.442695
    %v1651 = vpow.pop %v1650
    %v1652 = vmul.f32 %v1557, 1.442695
    %v1653 = vpow.pop %v1652
    %v1654 = vmul.f32 %v1558, 1.442695
    %v1655 = vpow.pop %v1654
    %v1656 = vmul.f32 %v1559, 1.442695
    %v1657 = vpow.pop %v1656
    %v1658 = vmul.f32 %v1560, 1.442695
    %v1659 = vpow.pop %v1658
    %v1660 = vmul.f32 %v1561, 1.442695
    %v1661 = vpow.pop %v1660
    %v1662 = vmul.f32 %v1562, 1.442695
    %v1663 = vpow.pop %v1662
    %v1664 = vmul.f32 %v1563, 1.442695
    %v1665 = vpow.pop %v1664
    %v1666 = vmul.f32 %v1564, 1.442695
    %v1667 = vpow.pop %v1666
    %v1668 = vmul.f32 %v1565, 1.442695
    %v1669 = vpow.pop %v1668
    %v1670 = vmul.f32 %v1566, 1.442695
    %v1671 = vpow.pop %v1670
    %v1672 = vmul.f32 %v1567, 1.442695
    %v1673 = vpow.pop %v1672
    %v1674 = vmul.f32 %v1568, 1.442695
    %v1675 = vpow.pop %v1674
    %v1676 = vmul.f32 %v1569, 1.442695
    %v1677 = vpow.pop %v1676
    %v1678 = vmul.f32 %v1570, 1.442695
    %v1679 = vpow.pop %v1678
    %v1680 = vmul.f32 %v1571, 1.442695
    %v1681 = vpow.pop %v1680
    %v1682 = vmul.f32 %v1572, 1.442695
    %v1683 = vpow.pop %v1682
    %v1684 = vmul.f32 %v1573, 1.442695
    %v1685 = vpow.pop %v1684
    %v1686 = vmul.f32 %v1574, 1.442695
    %v1687 = vpow.pop %v1686
    %v1688 = vmul.f32 %v1575, 1.442695
    %v1689 = vpow.pop %v1688
    %v1690 = vmul.f32 %v1576, 1.442695
    %v1691 = vpow.pop %v1690
    %v1692 = vmul.f32 %v1577, 1.442695
    %v1693 = vpow.pop %v1692
    %v1694 = vmul.f32 %v1578, 1.442695
    %v1695 = vpow.pop %v1694
    %v1696 = vmul.f32 %v1579, 1.442695
    %v1697 = vpow.pop %v1696
    %v1698 = vmul.f32 %v1580, 1.442695
    %v1699 = vpow.pop %v1698
    %v1700 = vmul.f32 %v1581, 1.442695
    %v1701 = vpow.pop %v1700
    %v1702 = vmul.f32 %v1582, 1.442695
    %v1703 = vpow.pop %v1702
    %v1704 = vmul.f32 %v1583, 1.442695
    %v1705 = vpow.pop %v1704
    %v1706 = vmul.f32 %v1584, 1.442695
    %v1707 = vpow.pop %v1706
    %v1708 = vmul.f32 %v1585, 1.442695
    %v1709 = vpow.pop %v1708
    %v1710 = vmul.f32 %v1586, 1.442695
    %v1711 = vpow.pop %v1710
    %v1712 = vmul.f32 %v1587, 1.442695
    %v1713 = vpow.pop %v1712
    %v1714 = vmul.f32 %v1588, 1.442695
    %v1715 = vpow.pop %v1714
    %v1716 = vmul.f32 %v1589, 1.442695
    %v1717 = vpow.pop %v1716
    %v1719 = vlaneseq
    %v1720 = vshrl.u32 %v1719, 7
    %v1721 = vsub.s32 0, %v1720
    %v1722 = vrot.slane %v86, %v1721
    %v1723 = vlaneseq
    %v1724 = vshrl.u32 %v1723, 7
    %v1725 = vsub.s32 1, %v1724
    %v1726 = vrot.slane %v86, %v1725
    %v1727 = vlaneseq
    %v1728 = vshrl.u32 %v1727, 7
    %v1729 = vsub.s32 2, %v1728
    %v1730 = vrot.slane %v86, %v1729
    %v1731 = vlaneseq
    %v1732 = vshrl.u32 %v1731, 7
    %v1733 = vsub.s32 3, %v1732
    %v1734 = vrot.slane %v86, %v1733
    %1740 = vset.pattern.permute.xlu0 127
    %1741 = vperm.xlu0 %1740, %v272
    %v1742 = vpop.permute.xlu0 %1741
    %1745 = vset.pattern.permute.xlu0 127
    %1746 = vperm.xlu0 %1745, %v276
    %v1747 = vpop.permute.xlu0 %1746
    %1750 = vset.pattern.permute.xlu0 127
    %1751 = vperm.xlu0 %1750, %v282
    %v1752 = vpop.permute.xlu0 %1751
    %1755 = vset.pattern.permute.xlu0 127
    %1756 = vperm.xlu0 %1755, %v286
    %v1757 = vpop.permute.xlu0 %1756
    %1760 = vset.pattern.permute.xlu0 127
    %1761 = vperm.xlu0 %1760, %v292
    %v1762 = vpop.permute.xlu0 %1761
    %1765 = vset.pattern.permute.xlu0 127
    %1766 = vperm.xlu0 %1765, %v296
    %v1767 = vpop.permute.xlu0 %1766
    %1770 = vset.pattern.permute.xlu0 127
    %1771 = vperm.xlu0 %1770, %v302
    %v1772 = vpop.permute.xlu0 %1771
    %1775 = vset.pattern.permute.xlu0 127
    %1776 = vperm.xlu0 %1775, %v306
    %v1777 = vpop.permute.xlu0 %1776
    %1780 = vset.pattern.permute.xlu0 127
    %1781 = vperm.xlu0 %1780, %v312
    %v1782 = vpop.permute.xlu0 %1781
    %1785 = vset.pattern.permute.xlu0 127
    %1786 = vperm.xlu0 %1785, %v316
    %v1787 = vpop.permute.xlu0 %1786
    %1790 = vset.pattern.permute.xlu0 127
    %1791 = vperm.xlu0 %1790, %v322
    %v1792 = vpop.permute.xlu0 %1791
    %1795 = vset.pattern.permute.xlu0 127
    %1796 = vperm.xlu0 %1795, %v326
    %v1797 = vpop.permute.xlu0 %1796
    %1800 = vset.pattern.permute.xlu0 127
    %1801 = vperm.xlu0 %1800, %v332
    %v1802 = vpop.permute.xlu0 %1801
    %1805 = vset.pattern.permute.xlu0 127
    %1806 = vperm.xlu0 %1805, %v336
    %v1807 = vpop.permute.xlu0 %1806
    %1810 = vset.pattern.permute.xlu0 127
    %1811 = vperm.xlu0 %1810, %v342
    %v1812 = vpop.permute.xlu0 %1811
    %1815 = vset.pattern.permute.xlu0 127
    %1816 = vperm.xlu0 %1815, %v346
    %v1817 = vpop.permute.xlu0 %1816
    %vm1819 = vcmp.eq.f32.partialorder %v1722, %v1742
    %vm1820 = vcmp.eq.f32.partialorder %v1726, %v1742
    %vm1821 = vcmp.eq.f32.partialorder %v1730, %v1742
    %vm1822 = vcmp.eq.f32.partialorder %v1734, %v1742
    %vm1823 = vcmp.eq.f32.partialorder %v1722, %v1747
    %vm1824 = vcmp.eq.f32.partialorder %v1726, %v1747
    %vm1825 = vcmp.eq.f32.partialorder %v1730, %v1747
    %vm1826 = vcmp.eq.f32.partialorder %v1734, %v1747
    %vm1827 = vcmp.eq.f32.partialorder %v1722, %v1752
    %vm1828 = vcmp.eq.f32.partialorder %v1726, %v1752
    %vm1829 = vcmp.eq.f32.partialorder %v1730, %v1752
    %vm1830 = vcmp.eq.f32.partialorder %v1734, %v1752
    %vm1831 = vcmp.eq.f32.partialorder %v1722, %v1757
    %vm1832 = vcmp.eq.f32.partialorder %v1726, %v1757
    %vm1833 = vcmp.eq.f32.partialorder %v1730, %v1757
    %vm1834 = vcmp.eq.f32.partialorder %v1734, %v1757
    %vm1835 = vcmp.eq.f32.partialorder %v1722, %v1762
    %vm1836 = vcmp.eq.f32.partialorder %v1726, %v1762
    %vm1837 = vcmp.eq.f32.partialorder %v1730, %v1762
    %vm1838 = vcmp.eq.f32.partialorder %v1734, %v1762
    %vm1839 = vcmp.eq.f32.partialorder %v1722, %v1767
    %vm1840 = vcmp.eq.f32.partialorder %v1726, %v1767
    %vm1841 = vcmp.eq.f32.partialorder %v1730, %v1767
    %vm1842 = vcmp.eq.f32.partialorder %v1734, %v1767
    %vm1843 = vcmp.eq.f32.partialorder %v1722, %v1772
    %vm1844 = vcmp.eq.f32.partialorder %v1726, %v1772
    %vm1845 = vcmp.eq.f32.partialorder %v1730, %v1772
    %vm1846 = vcmp.eq.f32.partialorder %v1734, %v1772
    %vm1847 = vcmp.eq.f32.partialorder %v1722, %v1777
    %vm1848 = vcmp.eq.f32.partialorder %v1726, %v1777
    %vm1849 = vcmp.eq.f32.partialorder %v1730, %v1777
    %vm1850 = vcmp.eq.f32.partialorder %v1734, %v1777
    %vm1851 = vcmp.eq.f32.partialorder %v1722, %v1782
    %vm1852 = vcmp.eq.f32.partialorder %v1726, %v1782
    %vm1853 = vcmp.eq.f32.partialorder %v1730, %v1782
    %vm1854 = vcmp.eq.f32.partialorder %v1734, %v1782
    %vm1855 = vcmp.eq.f32.partialorder %v1722, %v1787
    %vm1856 = vcmp.eq.f32.partialorder %v1726, %v1787
    %vm1857 = vcmp.eq.f32.partialorder %v1730, %v1787
    %vm1858 = vcmp.eq.f32.partialorder %v1734, %v1787
    %vm1859 = vcmp.eq.f32.partialorder %v1722, %v1792
    %vm1860 = vcmp.eq.f32.partialorder %v1726, %v1792
    %vm1861 = vcmp.eq.f32.partialorder %v1730, %v1792
    %vm1862 = vcmp.eq.f32.partialorder %v1734, %v1792
    %vm1863 = vcmp.eq.f32.partialorder %v1722, %v1797
    %vm1864 = vcmp.eq.f32.partialorder %v1726, %v1797
    %vm1865 = vcmp.eq.f32.partialorder %v1730, %v1797
    %vm1866 = vcmp.eq.f32.partialorder %v1734, %v1797
    %vm1867 = vcmp.eq.f32.partialorder %v1722, %v1802
    %vm1868 = vcmp.eq.f32.partialorder %v1726, %v1802
    %vm1869 = vcmp.eq.f32.partialorder %v1730, %v1802
    %vm1870 = vcmp.eq.f32.partialorder %v1734, %v1802
    %vm1871 = vcmp.eq.f32.partialorder %v1722, %v1807
    %vm1872 = vcmp.eq.f32.partialorder %v1726, %v1807
    %vm1873 = vcmp.eq.f32.partialorder %v1730, %v1807
    %vm1874 = vcmp.eq.f32.partialorder %v1734, %v1807
    %vm1875 = vcmp.eq.f32.partialorder %v1722, %v1812
    %vm1876 = vcmp.eq.f32.partialorder %v1726, %v1812
    %vm1877 = vcmp.eq.f32.partialorder %v1730, %v1812
    %vm1878 = vcmp.eq.f32.partialorder %v1734, %v1812
    %vm1879 = vcmp.eq.f32.partialorder %v1722, %v1817
    %vm1880 = vcmp.eq.f32.partialorder %v1726, %v1817
    %vm1881 = vcmp.eq.f32.partialorder %v1730, %v1817
    %vm1882 = vcmp.eq.f32.partialorder %v1734, %v1817
    %v1883 = vsel %vm1819, 1, 0
    %v1884 = vsel %vm1820, 1, 0
    %v1885 = vsel %vm1821, 1, 0
    %v1886 = vsel %vm1822, 1, 0
    %v1887 = vsel %vm1823, 1, 0
    %v1888 = vsel %vm1824, 1, 0
    %v1889 = vsel %vm1825, 1, 0
    %v1890 = vsel %vm1826, 1, 0
    %v1891 = vsel %vm1827, 1, 0
    %v1892 = vsel %vm1828, 1, 0
    %v1893 = vsel %vm1829, 1, 0
    %v1894 = vsel %vm1830, 1, 0
    %v1895 = vsel %vm1831, 1, 0
    %v1896 = vsel %vm1832, 1, 0
    %v1897 = vsel %vm1833, 1, 0
    %v1898 = vsel %vm1834, 1, 0
    %v1899 = vsel %vm1835, 1, 0
    %v1900 = vsel %vm1836, 1, 0
    %v1901 = vsel %vm1837, 1, 0
    %v1902 = vsel %vm1838, 1, 0
    %v1903 = vsel %vm1839, 1, 0
    %v1904 = vsel %vm1840, 1, 0
    %v1905 = vsel %vm1841, 1, 0
    %v1906 = vsel %vm1842, 1, 0
    %v1907 = vsel %vm1843, 1, 0
    %v1908 = vsel %vm1844, 1, 0
    %v1909 = vsel %vm1845, 1, 0
    %v1910 = vsel %vm1846, 1, 0
    %v1911 = vsel %vm1847, 1, 0
    %v1912 = vsel %vm1848, 1, 0
    %v1913 = vsel %vm1849, 1, 0
    %v1914 = vsel %vm1850, 1, 0
    %v1915 = vsel %vm1851, 1, 0
    %v1916 = vsel %vm1852, 1, 0
    %v1917 = vsel %vm1853, 1, 0
    %v1918 = vsel %vm1854, 1, 0
    %v1919 = vsel %vm1855, 1, 0
    %v1920 = vsel %vm1856, 1, 0
    %v1921 = vsel %vm1857, 1, 0
    %v1922 = vsel %vm1858, 1, 0
    %v1923 = vsel %vm1859, 1, 0
    %v1924 = vsel %vm1860, 1, 0
    %v1925 = vsel %vm1861, 1, 0
    %v1926 = vsel %vm1862, 1, 0
    %v1927 = vsel %vm1863, 1, 0
    %v1928 = vsel %vm1864, 1, 0
    %v1929 = vsel %vm1865, 1, 0
    %v1930 = vsel %vm1866, 1, 0
    %v1931 = vsel %vm1867, 1, 0
    %v1932 = vsel %vm1868, 1, 0
    %v1933 = vsel %vm1869, 1, 0
    %v1934 = vsel %vm1870, 1, 0
    %v1935 = vsel %vm1871, 1, 0
    %v1936 = vsel %vm1872, 1, 0
    %v1937 = vsel %vm1873, 1, 0
    %v1938 = vsel %vm1874, 1, 0
    %v1939 = vsel %vm1875, 1, 0
    %v1940 = vsel %vm1876, 1, 0
    %v1941 = vsel %vm1877, 1, 0
    %v1942 = vsel %vm1878, 1, 0
    %v1943 = vsel %vm1879, 1, 0
    %v1944 = vsel %vm1880, 1, 0
    %v1945 = vsel %vm1881, 1, 0
    %v1946 = vsel %vm1882, 1, 0
    %v1947 = vcvt.s32.f32 %v1883
    %v1948 = vcvt.s32.f32 %v1884
    %v1949 = vcvt.s32.f32 %v1885
    %v1950 = vcvt.s32.f32 %v1886
    %v1951 = vcvt.s32.f32 %v1887
    %v1952 = vcvt.s32.f32 %v1888
    %v1953 = vcvt.s32.f32 %v1889
    %v1954 = vcvt.s32.f32 %v1890
    %v1955 = vcvt.s32.f32 %v1891
    %v1956 = vcvt.s32.f32 %v1892
    %v1957 = vcvt.s32.f32 %v1893
    %v1958 = vcvt.s32.f32 %v1894
    %v1959 = vcvt.s32.f32 %v1895
    %v1960 = vcvt.s32.f32 %v1896
    %v1961 = vcvt.s32.f32 %v1897
    %v1962 = vcvt.s32.f32 %v1898
    %v1963 = vcvt.s32.f32 %v1899
    %v1964 = vcvt.s32.f32 %v1900
    %v1965 = vcvt.s32.f32 %v1901
    %v1966 = vcvt.s32.f32 %v1902
    %v1967 = vcvt.s32.f32 %v1903
    %v1968 = vcvt.s32.f32 %v1904
    %v1969 = vcvt.s32.f32 %v1905
    %v1970 = vcvt.s32.f32 %v1906
    %v1971 = vcvt.s32.f32 %v1907
    %v1972 = vcvt.s32.f32 %v1908
    %v1973 = vcvt.s32.f32 %v1909
    %v1974 = vcvt.s32.f32 %v1910
    %v1975 = vcvt.s32.f32 %v1911
    %v1976 = vcvt.s32.f32 %v1912
    %v1977 = vcvt.s32.f32 %v1913
    %v1978 = vcvt.s32.f32 %v1914
    %v1979 = vcvt.s32.f32 %v1915
    %v1980 = vcvt.s32.f32 %v1916
    %v1981 = vcvt.s32.f32 %v1917
    %v1982 = vcvt.s32.f32 %v1918
    %v1983 = vcvt.s32.f32 %v1919
    %v1984 = vcvt.s32.f32 %v1920
    %v1985 = vcvt.s32.f32 %v1921
    %v1986 = vcvt.s32.f32 %v1922
    %v1987 = vcvt.s32.f32 %v1923
    %v1988 = vcvt.s32.f32 %v1924
    %v1989 = vcvt.s32.f32 %v1925
    %v1990 = vcvt.s32.f32 %v1926
    %v1991 = vcvt.s32.f32 %v1927
    %v1992 = vcvt.s32.f32 %v1928
    %v1993 = vcvt.s32.f32 %v1929
    %v1994 = vcvt.s32.f32 %v1930
    %v1995 = vcvt.s32.f32 %v1931
    %v1996 = vcvt.s32.f32 %v1932
    %v1997 = vcvt.s32.f32 %v1933
    %v1998 = vcvt.s32.f32 %v1934
    %v1999 = vcvt.s32.f32 %v1935
    %v2000 = vcvt.s32.f32 %v1936
    %v2001 = vcvt.s32.f32 %v1937
    %v2002 = vcvt.s32.f32 %v1938
    %v2003 = vcvt.s32.f32 %v1939
    %v2004 = vcvt.s32.f32 %v1940
    %v2005 = vcvt.s32.f32 %v1941
    %v2006 = vcvt.s32.f32 %v1942
    %v2007 = vcvt.s32.f32 %v1943
    %v2008 = vcvt.s32.f32 %v1944
    %v2009 = vcvt.s32.f32 %v1945
    %v2010 = vcvt.s32.f32 %v1946
    %v2012 = vlaneseq
    %v2013 = vshrl.u32 %v2012, 7
    %v2014 = vsub.s32 0, %v2013
    %v2015 = vrot.slane %v90, %v2014
    %v2016 = vlaneseq
    %v2017 = vshrl.u32 %v2016, 7
    %v2018 = vsub.s32 1, %v2017
    %v2019 = vrot.slane %v90, %v2018
    %v2020 = vlaneseq
    %v2021 = vshrl.u32 %v2020, 7
    %v2022 = vsub.s32 2, %v2021
    %v2023 = vrot.slane %v90, %v2022
    %v2024 = vlaneseq
    %v2025 = vshrl.u32 %v2024, 7
    %v2026 = vsub.s32 3, %v2025
    %v2027 = vrot.slane %v90, %v2026
    %v2032 = vmul.f32 %v2015, %v1591
    %v2033 = vmul.f32 %v2019, %v1593
    %v2034 = vmul.f32 %v2023, %v1595
    %v2035 = vmul.f32 %v2027, %v1597
    %v2036 = vmul.f32 %v2015, %v1599
    %v2037 = vmul.f32 %v2019, %v1601
    %v2038 = vmul.f32 %v2023, %v1603
    %v2039 = vmul.f32 %v2027, %v1605
    %v2040 = vmul.f32 %v2015, %v1607
    %v2041 = vmul.f32 %v2019, %v1609
    %v2042 = vmul.f32 %v2023, %v1611
    %v2043 = vmul.f32 %v2027, %v1613
    %v2044 = vmul.f32 %v2015, %v1615
    %v2045 = vmul.f32 %v2019, %v1617
    %v2046 = vmul.f32 %v2023, %v1619
    %v2047 = vmul.f32 %v2027, %v1621
    %v2048 = vmul.f32 %v2015, %v1623
    %v2049 = vmul.f32 %v2019, %v1625
    %v2050 = vmul.f32 %v2023, %v1627
    %v2051 = vmul.f32 %v2027, %v1629
    %v2052 = vmul.f32 %v2015, %v1631
    %v2053 = vmul.f32 %v2019, %v1633
    %v2054 = vmul.f32 %v2023, %v1635
    %v2055 = vmul.f32 %v2027, %v1637
    %v2056 = vmul.f32 %v2015, %v1639
    %v2057 = vmul.f32 %v2019, %v1641
    %v2058 = vmul.f32 %v2023, %v1643
    %v2059 = vmul.f32 %v2027, %v1645
    %v2060 = vmul.f32 %v2015, %v1647
    %v2061 = vmul.f32 %v2019, %v1649
    %v2062 = vmul.f32 %v2023, %v1651
    %v2063 = vmul.f32 %v2027, %v1653
    %v2064 = vmul.f32 %v2015, %v1655
    %v2065 = vmul.f32 %v2019, %v1657
    %v2066 = vmul.f32 %v2023, %v1659
    %v2067 = vmul.f32 %v2027, %v1661
    %v2068 = vmul.f32 %v2015, %v1663
    %v2069 = vmul.f32 %v2019, %v1665
    %v2070 = vmul.f32 %v2023, %v1667
    %v2071 = vmul.f32 %v2027, %v1669
    %v2072 = vmul.f32 %v2015, %v1671
    %v2073 = vmul.f32 %v2019, %v1673
    %v2074 = vmul.f32 %v2023, %v1675
    %v2075 = vmul.f32 %v2027, %v1677
    %v2076 = vmul.f32 %v2015, %v1679
    %v2077 = vmul.f32 %v2019, %v1681
    %v2078 = vmul.f32 %v2023, %v1683
    %v2079 = vmul.f32 %v2027, %v1685
    %v2080 = vmul.f32 %v2015, %v1687
    %v2081 = vmul.f32 %v2019, %v1689
    %v2082 = vmul.f32 %v2023, %v1691
    %v2083 = vmul.f32 %v2027, %v1693
    %v2084 = vmul.f32 %v2015, %v1695
    %v2085 = vmul.f32 %v2019, %v1697
    %v2086 = vmul.f32 %v2023, %v1699
    %v2087 = vmul.f32 %v2027, %v1701
    %v2088 = vmul.f32 %v2015, %v1703
    %v2089 = vmul.f32 %v2019, %v1705
    %v2090 = vmul.f32 %v2023, %v1707
    %v2091 = vmul.f32 %v2027, %v1709
    %v2092 = vmul.f32 %v2015, %v1711
    %v2093 = vmul.f32 %v2019, %v1713
    %v2094 = vmul.f32 %v2023, %v1715
    %v2095 = vmul.f32 %v2027, %v1717
    %v2096 = vadd.f32 %v1947, %v2032
    %v2097 = vadd.f32 %v1948, %v2033
    %v2098 = vadd.f32 %v1949, %v2034
    %v2099 = vadd.f32 %v1950, %v2035
    %v2100 = vadd.f32 %v1951, %v2036
    %v2101 = vadd.f32 %v1952, %v2037
    %v2102 = vadd.f32 %v1953, %v2038
    %v2103 = vadd.f32 %v1954, %v2039
    %v2104 = vadd.f32 %v1955, %v2040
    %v2105 = vadd.f32 %v1956, %v2041
    %v2106 = vadd.f32 %v1957, %v2042
    %v2107 = vadd.f32 %v1958, %v2043
    %v2108 = vadd.f32 %v1959, %v2044
    %v2109 = vadd.f32 %v1960, %v2045
    %v2110 = vadd.f32 %v1961, %v2046
    %v2111 = vadd.f32 %v1962, %v2047
    %v2112 = vadd.f32 %v1963, %v2048
    %v2113 = vadd.f32 %v1964, %v2049
    %v2114 = vadd.f32 %v1965, %v2050
    %v2115 = vadd.f32 %v1966, %v2051
    %v2116 = vadd.f32 %v1967, %v2052
    %v2117 = vadd.f32 %v1968, %v2053
    %v2118 = vadd.f32 %v1969, %v2054
    %v2119 = vadd.f32 %v1970, %v2055
    %v2120 = vadd.f32 %v1971, %v2056
    %v2121 = vadd.f32 %v1972, %v2057
    %v2122 = vadd.f32 %v1973, %v2058
    %v2123 = vadd.f32 %v1974, %v2059
    %v2124 = vadd.f32 %v1975, %v2060
    %v2125 = vadd.f32 %v1976, %v2061
    %v2126 = vadd.f32 %v1977, %v2062
    %v2127 = vadd.f32 %v1978, %v2063
    %v2128 = vadd.f32 %v1979, %v2064
    %v2129 = vadd.f32 %v1980, %v2065
    %v2130 = vadd.f32 %v1981, %v2066
    %v2131 = vadd.f32 %v1982, %v2067
    %v2132 = vadd.f32 %v1983, %v2068
    %v2133 = vadd.f32 %v1984, %v2069
    %v2134 = vadd.f32 %v1985, %v2070
    %v2135 = vadd.f32 %v1986, %v2071
    %v2136 = vadd.f32 %v1987, %v2072
    %v2137 = vadd.f32 %v1988, %v2073
    %v2138 = vadd.f32 %v1989, %v2074
    %v2139 = vadd.f32 %v1990, %v2075
    %v2140 = vadd.f32 %v1991, %v2076
    %v2141 = vadd.f32 %v1992, %v2077
    %v2142 = vadd.f32 %v1993, %v2078
    %v2143 = vadd.f32 %v1994, %v2079
    %v2144 = vadd.f32 %v1995, %v2080
    %v2145 = vadd.f32 %v1996, %v2081
    %v2146 = vadd.f32 %v1997, %v2082
    %v2147 = vadd.f32 %v1998, %v2083
    %v2148 = vadd.f32 %v1999, %v2084
    %v2149 = vadd.f32 %v2000, %v2085
    %v2150 = vadd.f32 %v2001, %v2086
    %v2151 = vadd.f32 %v2002, %v2087
    %v2152 = vadd.f32 %v2003, %v2088
    %v2153 = vadd.f32 %v2004, %v2089
    %v2154 = vadd.f32 %v2005, %v2090
    %v2155 = vadd.f32 %v2006, %v2091
    %v2156 = vadd.f32 %v2007, %v2092
    %v2157 = vadd.f32 %v2008, %v2093
    %v2158 = vadd.f32 %v2009, %v2094
    %v2159 = vadd.f32 %v2010, %v2095
    %v2160 = vpack.c.bf16 %v2100, %v2096
    %v2161 = vpack.c.bf16 %v2101, %v2097
    %v2162 = vpack.c.bf16 %v2102, %v2098
    %v2163 = vpack.c.bf16 %v2103, %v2099
    %v2164 = vpack.c.bf16 %v2108, %v2104
    %v2165 = vpack.c.bf16 %v2109, %v2105
    %v2166 = vpack.c.bf16 %v2110, %v2106
    %v2167 = vpack.c.bf16 %v2111, %v2107
    %v2168 = vpack.c.bf16 %v2116, %v2112
    %v2169 = vpack.c.bf16 %v2117, %v2113
    %v2170 = vpack.c.bf16 %v2118, %v2114
    %v2171 = vpack.c.bf16 %v2119, %v2115
    %v2172 = vpack.c.bf16 %v2124, %v2120
    %v2173 = vpack.c.bf16 %v2125, %v2121
    %v2174 = vpack.c.bf16 %v2126, %v2122
    %v2175 = vpack.c.bf16 %v2127, %v2123
    %v2176 = vpack.c.bf16 %v2132, %v2128
    %v2177 = vpack.c.bf16 %v2133, %v2129
    %v2178 = vpack.c.bf16 %v2134, %v2130
    %v2179 = vpack.c.bf16 %v2135, %v2131
    %v2180 = vpack.c.bf16 %v2140, %v2136
    %v2181 = vpack.c.bf16 %v2141, %v2137
    %v2182 = vpack.c.bf16 %v2142, %v2138
    %v2183 = vpack.c.bf16 %v2143, %v2139
    %v2184 = vpack.c.bf16 %v2148, %v2144
    %v2185 = vpack.c.bf16 %v2149, %v2145
    %v2186 = vpack.c.bf16 %v2150, %v2146
    %v2187 = vpack.c.bf16 %v2151, %v2147
    %v2188 = vpack.c.bf16 %v2156, %v2152
    %v2189 = vpack.c.bf16 %v2157, %v2153
    %v2190 = vpack.c.bf16 %v2158, %v2154
    %v2191 = vpack.c.bf16 %v2159, %v2155
    %v2192 = vld [vmem:[#allocation7] sm:$0xf]
    %v2193 = vld [vmem:[#allocation7 + $0x4] sm:$0xf]
    %v2194 = vld [vmem:[#allocation7 + $0x8] sm:$0xf]
    %v2195 = vld [vmem:[#allocation7 + $0xc] sm:$0xf]
    %v2196 = vld [vmem:[#allocation7 + $0x10] sm:$0xf]
    %v2197 = vld [vmem:[#allocation7 + $0x14] sm:$0xf]
    %v2198 = vld [vmem:[#allocation7 + $0x18] sm:$0xf]
    %v2199 = vld [vmem:[#allocation7 + $0x1c] sm:$0xf]
    %v2200 = vld [vmem:[#allocation7 + $0x20] sm:$0xf]
    %v2201 = vld [vmem:[#allocation7 + $0x24] sm:$0xf]
    %v2202 = vld [vmem:[#allocation7 + $0x28] sm:$0xf]
    %v2203 = vld [vmem:[#allocation7 + $0x2c] sm:$0xf]
    %v2204 = vld [vmem:[#allocation7 + $0x30] sm:$0xf]
    %v2205 = vld [vmem:[#allocation7 + $0x34] sm:$0xf]
    %v2206 = vld [vmem:[#allocation7 + $0x38] sm:$0xf]
    %v2207 = vld [vmem:[#allocation7 + $0x3c] sm:$0xf]
    %v2208 = vld [vmem:[#allocation7 + $0x40] sm:$0xf]
    %v2209 = vld [vmem:[#allocation7 + $0x44] sm:$0xf]
    %v2210 = vld [vmem:[#allocation7 + $0x48] sm:$0xf]
    %v2211 = vld [vmem:[#allocation7 + $0x4c] sm:$0xf]
    %v2212 = vld [vmem:[#allocation7 + $0x50] sm:$0xf]
    %v2213 = vld [vmem:[#allocation7 + $0x54] sm:$0xf]
    %v2214 = vld [vmem:[#allocation7 + $0x58] sm:$0xf]
    %v2215 = vld [vmem:[#allocation7 + $0x5c] sm:$0xf]
    %v2216 = vld [vmem:[#allocation7 + $0x60] sm:$0xf]
    %v2217 = vld [vmem:[#allocation7 + $0x64] sm:$0xf]
    %v2218 = vld [vmem:[#allocation7 + $0x68] sm:$0xf]
    %v2219 = vld [vmem:[#allocation7 + $0x6c] sm:$0xf]
    %v2220 = vld [vmem:[#allocation7 + $0x70] sm:$0xf]
    %v2221 = vld [vmem:[#allocation7 + $0x74] sm:$0xf]
    %v2222 = vld [vmem:[#allocation7 + $0x78] sm:$0xf]
    %v2223 = vld [vmem:[#allocation7 + $0x7c] sm:$0xf]
    %v2224 = vld [vmem:[#allocation7 + $0x80] sm:$0xf]
    %v2225 = vld [vmem:[#allocation7 + $0x84] sm:$0xf]
    %v2226 = vld [vmem:[#allocation7 + $0x88] sm:$0xf]
    %v2227 = vld [vmem:[#allocation7 + $0x8c] sm:$0xf]
    %v2228 = vld [vmem:[#allocation7 + $0x90] sm:$0xf]
    %v2229 = vld [vmem:[#allocation7 + $0x94] sm:$0xf]
    %v2230 = vld [vmem:[#allocation7 + $0x98] sm:$0xf]
    %v2231 = vld [vmem:[#allocation7 + $0x9c] sm:$0xf]
    %v2232 = vld [vmem:[#allocation7 + $0xa0] sm:$0xf]
    %v2233 = vld [vmem:[#allocation7 + $0xa4] sm:$0xf]
    %v2234 = vld [vmem:[#allocation7 + $0xa8] sm:$0xf]
    %v2235 = vld [vmem:[#allocation7 + $0xac] sm:$0xf]
    %v2236 = vld [vmem:[#allocation7 + $0xb0] sm:$0xf]
    %v2237 = vld [vmem:[#allocation7 + $0xb4] sm:$0xf]
    %v2238 = vld [vmem:[#allocation7 + $0xb8] sm:$0xf]
    %v2239 = vld [vmem:[#allocation7 + $0xbc] sm:$0xf]
    %v2240 = vld [vmem:[#allocation7 + $0xc0] sm:$0xf]
    %v2241 = vld [vmem:[#allocation7 + $0xc4] sm:$0xf]
    %v2242 = vld [vmem:[#allocation7 + $0xc8] sm:$0xf]
    %v2243 = vld [vmem:[#allocation7 + $0xcc] sm:$0xf]
    %v2244 = vld [vmem:[#allocation7 + $0xd0] sm:$0xf]
    %v2245 = vld [vmem:[#allocation7 + $0xd4] sm:$0xf]
    %v2246 = vld [vmem:[#allocation7 + $0xd8] sm:$0xf]
    %v2247 = vld [vmem:[#allocation7 + $0xdc] sm:$0xf]
    %v2248 = vld [vmem:[#allocation7 + $0xe0] sm:$0xf]
    %v2249 = vld [vmem:[#allocation7 + $0xe4] sm:$0xf]
    %v2250 = vld [vmem:[#allocation7 + $0xe8] sm:$0xf]
    %v2251 = vld [vmem:[#allocation7 + $0xec] sm:$0xf]
    %v2252 = vld [vmem:[#allocation7 + $0xf0] sm:$0xf]
    %v2253 = vld [vmem:[#allocation7 + $0xf4] sm:$0xf]
    %v2254 = vld [vmem:[#allocation7 + $0xf8] sm:$0xf]
    %v2255 = vld [vmem:[#allocation7 + $0xfc] sm:$0xf]
    %v2256 = vld [vmem:[%s5] sm:$0x1]
    %v2258 = vlaneseq
    %v2259 = vshrl.u32 %v2258, 7
    %v2260 = vsub.s32 0, %v2259
    %v2261 = vrot.slane %v2256, %v2260
    %v2327 = vunpack.c.l.b16 %v2192
    %v2328 = vunpack.c.l.b16 %v2193
    %v2329 = vunpack.c.l.b16 %v2194
    %v2330 = vunpack.c.l.b16 %v2195
    %v2331 = vunpack.c.l.b16 %v2196
    %v2332 = vunpack.c.l.b16 %v2197
    %v2333 = vunpack.c.l.b16 %v2198
    %v2334 = vunpack.c.l.b16 %v2199
    %v2335 = vunpack.c.l.b16 %v2200
    %v2336 = vunpack.c.l.b16 %v2201
    %v2337 = vunpack.c.l.b16 %v2202
    %v2338 = vunpack.c.l.b16 %v2203
    %v2339 = vunpack.c.l.b16 %v2204
    %v2340 = vunpack.c.l.b16 %v2205
    %v2341 = vunpack.c.l.b16 %v2206
    %v2342 = vunpack.c.l.b16 %v2207
    %v2343 = vunpack.c.l.b16 %v2208
    %v2344 = vunpack.c.l.b16 %v2209
    %v2345 = vunpack.c.l.b16 %v2210
    %v2346 = vunpack.c.l.b16 %v2211
    %v2347 = vunpack.c.l.b16 %v2212
    %v2348 = vunpack.c.l.b16 %v2213
    %v2349 = vunpack.c.l.b16 %v2214
    %v2350 = vunpack.c.l.b16 %v2215
    %v2351 = vunpack.c.l.b16 %v2216
    %v2352 = vunpack.c.l.b16 %v2217
    %v2353 = vunpack.c.l.b16 %v2218
    %v2354 = vunpack.c.l.b16 %v2219
    %v2355 = vunpack.c.l.b16 %v2220
    %v2356 = vunpack.c.l.b16 %v2221
    %v2357 = vunpack.c.l.b16 %v2222
    %v2358 = vunpack.c.l.b16 %v2223
    %v2359 = vunpack.c.l.b16 %v2224
    %v2360 = vunpack.c.l.b16 %v2225
    %v2361 = vunpack.c.l.b16 %v2226
    %v2362 = vunpack.c.l.b16 %v2227
    %v2363 = vunpack.c.l.b16 %v2228
    %v2364 = vunpack.c.l.b16 %v2229
    %v2365 = vunpack.c.l.b16 %v2230
    %v2366 = vunpack.c.l.b16 %v2231
    %v2367 = vunpack.c.l.b16 %v2232
    %v2368 = vunpack.c.l.b16 %v2233
    %v2369 = vunpack.c.l.b16 %v2234
    %v2370 = vunpack.c.l.b16 %v2235
    %v2371 = vunpack.c.l.b16 %v2236
    %v2372 = vunpack.c.l.b16 %v2237
    %v2373 = vunpack.c.l.b16 %v2238
    %v2374 = vunpack.c.l.b16 %v2239
    %v2375 = vunpack.c.l.b16 %v2240
    %v2376 = vunpack.c.l.b16 %v2241
    %v2377 = vunpack.c.l.b16 %v2242
    %v2378 = vunpack.c.l.b16 %v2243
    %v2379 = vunpack.c.l.b16 %v2244
    %v2380 = vunpack.c.l.b16 %v2245
    %v2381 = vunpack.c.l.b16 %v2246
    %v2382 = vunpack.c.l.b16 %v2247
    %v2383 = vunpack.c.l.b16 %v2248
    %v2384 = vunpack.c.l.b16 %v2249
    %v2385 = vunpack.c.l.b16 %v2250
    %v2386 = vunpack.c.l.b16 %v2251
    %v2387 = vunpack.c.l.b16 %v2252
    %v2388 = vunpack.c.l.b16 %v2253
    %v2389 = vunpack.c.l.b16 %v2254
    %v2390 = vunpack.c.l.b16 %v2255
    %v2391 = vpack.c.b16 %v2328, %v2327
    %v2392 = vpack.c.b16 %v2330, %v2329
    %v2393 = vpack.c.b16 %v2332, %v2331
    %v2394 = vpack.c.b16 %v2334, %v2333
    %v2395 = vpack.c.b16 %v2336, %v2335
    %v2396 = vpack.c.b16 %v2338, %v2337
    %v2397 = vpack.c.b16 %v2340, %v2339
    %v2398 = vpack.c.b16 %v2342, %v2341
    %v2399 = vpack.c.b16 %v2344, %v2343
    %v2400 = vpack.c.b16 %v2346, %v2345
    %v2401 = vpack.c.b16 %v2348, %v2347
    %v2402 = vpack.c.b16 %v2350, %v2349
    %v2403 = vpack.c.b16 %v2352, %v2351
    %v2404 = vpack.c.b16 %v2354, %v2353
    %v2405 = vpack.c.b16 %v2356, %v2355
    %v2406 = vpack.c.b16 %v2358, %v2357
    %v2407 = vpack.c.b16 %v2360, %v2359
    %v2408 = vpack.c.b16 %v2362, %v2361
    %v2409 = vpack.c.b16 %v2364, %v2363
    %v2410 = vpack.c.b16 %v2366, %v2365
    %v2411 = vpack.c.b16 %v2368, %v2367
    %v2412 = vpack.c.b16 %v2370, %v2369
    %v2413 = vpack.c.b16 %v2372, %v2371
    %v2414 = vpack.c.b16 %v2374, %v2373
    %v2415 = vpack.c.b16 %v2376, %v2375
    %v2416 = vpack.c.b16 %v2378, %v2377
    %v2417 = vpack.c.b16 %v2380, %v2379
    %v2418 = vpack.c.b16 %v2382, %v2381
    %v2419 = vpack.c.b16 %v2384, %v2383
    %v2420 = vpack.c.b16 %v2386, %v2385
    %v2421 = vpack.c.b16 %v2388, %v2387
    %v2422 = vpack.c.b16 %v2390, %v2389
    %2455 = vmatprep.subr.bf16.mxu0 0
    %2456 = vmatpush1.bf16.msra.mxu0 %v2391
    %2457 = vmatprep.subr.bf16.mxu0 0
    %2458 = vmatpush1.bf16.msra.mxu0 %v2392
    %2459 = vmatprep.subr.bf16.mxu0 0
    %2460 = vmatpush1.bf16.msra.mxu0 %v2393
    %2461 = vmatprep.subr.bf16.mxu0 0
    %2462 = vmatpush1.bf16.msra.mxu0 %v2394
    %2463 = vmatprep.subr.bf16.mxu0 0
    %2464 = vmatpush1.bf16.msra.mxu0 %v2395
    %2465 = vmatprep.subr.bf16.mxu0 0
    %2466 = vmatpush1.bf16.msra.mxu0 %v2396
    %2467 = vmatprep.subr.bf16.mxu0 0
    %2468 = vmatpush1.bf16.msra.mxu0 %v2397
    %2469 = vmatprep.subr.bf16.mxu0 0
    %2470 = vmatpush1.bf16.msra.mxu0 %v2398
    %2471 = vmatprep.subr.bf16.mxu0 0
    %2472 = vmatpush1.bf16.msra.mxu0 %v2399
    %2473 = vmatprep.subr.bf16.mxu0 0
    %2474 = vmatpush1.bf16.msra.mxu0 %v2400
    %2475 = vmatprep.subr.bf16.mxu0 0
    %2476 = vmatpush1.bf16.msra.mxu0 %v2401
    %2477 = vmatprep.subr.bf16.mxu0 0
    %2478 = vmatpush1.bf16.msra.mxu0 %v2402
    %2479 = vmatprep.subr.bf16.mxu0 0
    %2480 = vmatpush1.bf16.msra.mxu0 %v2403
    %2481 = vmatprep.subr.bf16.mxu0 0
    %2482 = vmatpush1.bf16.msra.mxu0 %v2404
    %2483 = vmatprep.subr.bf16.mxu0 0
    %2484 = vmatpush1.bf16.msra.mxu0 %v2405
    %2485 = vmatprep.subr.bf16.mxu0 0
    %2486 = vmatpush1.bf16.msra.mxu0 %v2406
    %2487 = vmatprep.mubr.bf16.mxu0 %v2161
    %2488 = vmatmul.mubr.bf16.gmra.mrb[0].mxu0 %v2160
    %v2489 = vpop.f32.mrb[0].mxu0
    %v2490 = vadd.f32 %v2261, %v2489
    %v2491 = vpop.f32.mrb[0].mxu0
    %v2492 = vpop.f32.mrb[0].mxu0
    %v2493 = vadd.f32 %v2261, %v2492
    %v2494 = vpop.f32.mrb[0].mxu0
    %2495 = vmatprep.mubr.bf16.mxu0 %v2165
    %2496 = vmatmul.mubr.bf16.gmra.mrb[0].mxu0 %v2164
    %v2497 = vpop.f32.mrb[0].mxu0
    %v2498 = vadd.f32 %v2261, %v2497
    %v2499 = vpop.f32.mrb[0].mxu0
    %v2500 = vpop.f32.mrb[0].mxu0
    %v2501 = vadd.f32 %v2261, %v2500
    %v2502 = vpop.f32.mrb[0].mxu0
    %2503 = vmatprep.mubr.bf16.mxu0 %v2169
    %2504 = vmatmul.mubr.bf16.gmra.mrb[0].mxu0 %v2168
    %v2505 = vpop.f32.mrb[0].mxu0
    %v2506 = vadd.f32 %v2261, %v2505
    %v2507 = vpop.f32.mrb[0].mxu0
    %v2508 = vpop.f32.mrb[0].mxu0
    %v2509 = vadd.f32 %v2261, %v2508
    %v2510 = vpop.f32.mrb[0].mxu0
    %2511 = vmatprep.mubr.bf16.mxu0 %v2173
    %2512 = vmatmul.mubr.bf16.gmra.mrb[0].mxu0 %v2172
    %v2513 = vpop.f32.mrb[0].mxu0
    %v2514 = vadd.f32 %v2261, %v2513
    %v2515 = vpop.f32.mrb[0].mxu0
    %v2516 = vpop.f32.mrb[0].mxu0
    %v2517 = vadd.f32 %v2261, %v2516
    %v2518 = vpop.f32.mrb[0].mxu0
    %2519 = vmatprep.mubr.bf16.mxu0 %v2177
    %2520 = vmatmul.mubr.bf16.gmra.mrb[0].mxu0 %v2176
    %v2521 = vpop.f32.mrb[0].mxu0
    %v2522 = vadd.f32 %v2261, %v2521
    %v2523 = vpop.f32.mrb[0].mxu0
    %v2524 = vpop.f32.mrb[0].mxu0
    %v2525 = vadd.f32 %v2261, %v2524
    %v2526 = vpop.f32.mrb[0].mxu0
    %2527 = vmatprep.mubr.bf16.mxu0 %v2181
    %2528 = vmatmul.mubr.bf16.gmra.mrb[0].mxu0 %v2180
    %v2529 = vpop.f32.mrb[0].mxu0
    %v2530 = vadd.f32 %v2261, %v2529
    %v2531 = vpop.f32.mrb[0].mxu0
    %v2532 = vpop.f32.mrb[0].mxu0
    %v2533 = vadd.f32 %v2261, %v2532
    %v2534 = vpop.f32.mrb[0].mxu0
    %2535 = vmatprep.mubr.bf16.mxu0 %v2185
    %2536 = vmatmul.mubr.bf16.gmra.mrb[0].mxu0 %v2184
    %v2537 = vpop.f32.mrb[0].mxu0
    %v2538 = vadd.f32 %v2261, %v2537
    %v2539 = vpop.f32.mrb[0].mxu0
    %v2540 = vpop.f32.mrb[0].mxu0
    %v2541 = vadd.f32 %v2261, %v2540
    %v2542 = vpop.f32.mrb[0].mxu0
    %2543 = vmatprep.mubr.bf16.mxu0 %v2189
    %2544 = vmatmul.mubr.bf16.gmra.mrb[0].mxu0 %v2188
    %v2545 = vpop.f32.mrb[0].mxu0
    %v2546 = vadd.f32 %v2261, %v2545
    %v2547 = vpop.f32.mrb[0].mxu0
    %v2548 = vpop.f32.mrb[0].mxu0
    %v2549 = vadd.f32 %v2261, %v2548
    %v2550 = vpop.f32.mrb[0].mxu0
    %2551 = vdwg.mxu0
    %2552 = vmatprep.subr.bf16.mxu0 0
    %2553 = vmatpush1.bf16.msra.mxu0 %v2407
    %2554 = vmatprep.subr.bf16.mxu0 0
    %2555 = vmatpush1.bf16.msra.mxu0 %v2408
    %2556 = vmatprep.subr.bf16.mxu0 0
    %2557 = vmatpush1.bf16.msra.mxu0 %v2409
    %2558 = vmatprep.subr.bf16.mxu0 0
    %2559 = vmatpush1.bf16.msra.mxu0 %v2410
    %2560 = vmatprep.subr.bf16.mxu0 0
    %2561 = vmatpush1.bf16.msra.mxu0 %v2411
    %2562 = vmatprep.subr.bf16.mxu0 0
    %2563 = vmatpush1.bf16.msra.mxu0 %v2412
    %2564 = vmatprep.subr.bf16.mxu0 0
    %2565 = vmatpush1.bf16.msra.mxu0 %v2413
    %2566 = vmatprep.subr.bf16.mxu0 0
    %2567 = vmatpush1.bf16.msra.mxu0 %v2414
    %2568 = vmatprep.subr.bf16.mxu0 0
    %2569 = vmatpush1.bf16.msra.mxu0 %v2415
    %2570 = vmatprep.subr.bf16.mxu0 0
    %2571 = vmatpush1.bf16.msra.mxu0 %v2416
    %2572 = vmatprep.subr.bf16.mxu0 0
    %2573 = vmatpush1.bf16.msra.mxu0 %v2417
    %2574 = vmatprep.subr.bf16.mxu0 0
    %2575 = vmatpush1.bf16.msra.mxu0 %v2418
    %2576 = vmatprep.subr.bf16.mxu0 0
    %2577 = vmatpush1.bf16.msra.mxu0 %v2419
    %2578 = vmatprep.subr.bf16.mxu0 0
    %2579 = vmatpush1.bf16.msra.mxu0 %v2420
    %2580 = vmatprep.subr.bf16.mxu0 0
    %2581 = vmatpush1.bf16.msra.mxu0 %v2421
    %2582 = vmatprep.subr.bf16.mxu0 0
    %2583 = vmatpush1.bf16.msra.mxu0 %v2422
    %2584 = vmatprep.mubr.bf16.mxu0 %v2163
    %2585 = vmatmul.mubr.bf16.gmra.mrb[0].mxu0 %v2162
    %v2586 = vpop.f32.mrb[0].mxu0
    %v2587 = vadd.f32 %v2490, %v2586
    %v2588 = vpop.f32.mrb[0].mxu0
    %v2589 = vpop.f32.mrb[0].mxu0
    %v2590 = vadd.f32 %v2493, %v2589
    %v2591 = vpop.f32.mrb[0].mxu0
    %2592 = vmatprep.mubr.bf16.mxu0 %v2167
    %2593 = vmatmul.mubr.bf16.gmra.mrb[0].mxu0 %v2166
    %v2594 = vpop.f32.mrb[0].mxu0
    %v2595 = vadd.f32 %v2498, %v2594
    %v2596 = vpop.f32.mrb[0].mxu0
    %v2597 = vpop.f32.mrb[0].mxu0
    %v2598 = vadd.f32 %v2501, %v2597
    %v2599 = vpop.f32.mrb[0].mxu0
    %2600 = vmatprep.mubr.bf16.mxu0 %v2171
    %2601 = vmatmul.mubr.bf16.gmra.mrb[0].mxu0 %v2170
    %v2602 = vpop.f32.mrb[0].mxu0
    %v2603 = vadd.f32 %v2506, %v2602
    %v2604 = vpop.f32.mrb[0].mxu0
    %v2605 = vpop.f32.mrb[0].mxu0
    %v2606 = vadd.f32 %v2509, %v2605
    %v2607 = vpop.f32.mrb[0].mxu0
    %2608 = vmatprep.mubr.bf16.mxu0 %v2175
    %2609 = vmatmul.mubr.bf16.gmra.mrb[0].mxu0 %v2174
    %v2610 = vpop.f32.mrb[0].mxu0
    %v2611 = vadd.f32 %v2514, %v2610
    %v2612 = vpop.f32.mrb[0].mxu0
    %v2613 = vpop.f32.mrb[0].mxu0
    %v2614 = vadd.f32 %v2517, %v2613
    %v2615 = vpop.f32.mrb[0].mxu0
    %2616 = vmatprep.mubr.bf16.mxu0 %v2179
    %2617 = vmatmul.mubr.bf16.gmra.mrb[0].mxu0 %v2178
    %v2618 = vpop.f32.mrb[0].mxu0
    %v2619 = vadd.f32 %v2522, %v2618
    %v2620 = vpop.f32.mrb[0].mxu0
    %v2621 = vpop.f32.mrb[0].mxu0
    %v2622 = vadd.f32 %v2525, %v2621
    %v2623 = vpop.f32.mrb[0].mxu0
    %2624 = vmatprep.mubr.bf16.mxu0 %v2183
    %2625 = vmatmul.mubr.bf16.gmra.mrb[0].mxu0 %v2182
    %v2626 = vpop.f32.mrb[0].mxu0
    %v2627 = vadd.f32 %v2530, %v2626
    %v2628 = vpop.f32.mrb[0].mxu0
    %v2629 = vpop.f32.mrb[0].mxu0
    %v2630 = vadd.f32 %v2533, %v2629
    %v2631 = vpop.f32.mrb[0].mxu0
    %2632 = vmatprep.mubr.bf16.mxu0 %v2187
    %2633 = vmatmul.mubr.bf16.gmra.mrb[0].mxu0 %v2186
    %v2634 = vpop.f32.mrb[0].mxu0
    %v2635 = vadd.f32 %v2538, %v2634
    %v2636 = vpop.f32.mrb[0].mxu0
    %v2637 = vpop.f32.mrb[0].mxu0
    %v2638 = vadd.f32 %v2541, %v2637
    %v2639 = vpop.f32.mrb[0].mxu0
    %2640 = vmatprep.mubr.bf16.mxu0 %v2191
    %2641 = vmatmul.mubr.bf16.gmra.mrb[0].mxu0 %v2190
    %v2642 = vpop.f32.mrb[0].mxu0
    %v2643 = vadd.f32 %v2546, %v2642
    %v2644 = vpop.f32.mrb[0].mxu0
    %v2645 = vpop.f32.mrb[0].mxu0
    %v2646 = vadd.f32 %v2549, %v2645
    %v2647 = vpop.f32.mrb[0].mxu0
    %2648 = vdwg.mxu0
    %2649 = vadd.xlane.f32.xlu0 %v2587
    %v2650 = vpop.xlane.xlu0 %2649
    %2651 = vadd.xlane.f32.xlu0 %v2590
    %v2652 = vpop.xlane.xlu0 %2651
    %2653 = vadd.xlane.f32.xlu0 %v2595
    %v2654 = vpop.xlane.xlu0 %2653
    %2655 = vadd.xlane.f32.xlu0 %v2598
    %v2656 = vpop.xlane.xlu0 %2655
    %2657 = vadd.xlane.f32.xlu0 %v2603
    %v2658 = vpop.xlane.xlu0 %2657
    %2659 = vadd.xlane.f32.xlu0 %v2606
    %v2660 = vpop.xlane.xlu0 %2659
    %2661 = vadd.xlane.f32.xlu0 %v2611
    %v2662 = vpop.xlane.xlu0 %2661
    %2663 = vadd.xlane.f32.xlu0 %v2614
    %v2664 = vpop.xlane.xlu0 %2663
    %2665 = vadd.xlane.f32.xlu0 %v2619
    %v2666 = vpop.xlane.xlu0 %2665
    %2667 = vadd.xlane.f32.xlu0 %v2622
    %v2668 = vpop.xlane.xlu0 %2667
    %2669 = vadd.xlane.f32.xlu0 %v2627
    %v2670 = vpop.xlane.xlu0 %2669
    %2671 = vadd.xlane.f32.xlu0 %v2630
    %v2672 = vpop.xlane.xlu0 %2671
    %2673 = vadd.xlane.f32.xlu0 %v2635
    %v2674 = vpop.xlane.xlu0 %2673
    %2675 = vadd.xlane.f32.xlu0 %v2638
    %v2676 = vpop.xlane.xlu0 %2675
    %2677 = vadd.xlane.f32.xlu0 %v2643
    %v2678 = vpop.xlane.xlu0 %2677
    %2679 = vadd.xlane.f32.xlu0 %v2646
    %v2680 = vpop.xlane.xlu0 %2679
    %v2681 = vrcp.pop 128.0
    %v2682 = vmul.f32 %v2650, %v2681
    %v2683 = vmul.f32 %v2652, %v2681
    %v2684 = vmul.f32 %v2654, %v2681
    %v2685 = vmul.f32 %v2656, %v2681
    %v2686 = vmul.f32 %v2658, %v2681
    %v2687 = vmul.f32 %v2660, %v2681
    %v2688 = vmul.f32 %v2662, %v2681
    %v2689 = vmul.f32 %v2664, %v2681
    %v2690 = vmul.f32 %v2666, %v2681
    %v2691 = vmul.f32 %v2668, %v2681
    %v2692 = vmul.f32 %v2670, %v2681
    %v2693 = vmul.f32 %v2672, %v2681
    %v2694 = vmul.f32 %v2674, %v2681
    %v2695 = vmul.f32 %v2676, %v2681
    %v2696 = vmul.f32 %v2678, %v2681
    %v2697 = vmul.f32 %v2680, %v2681
    %v2698 = vsub.f32 %v2587, %v2682
    %v2699 = vsub.f32 %v2590, %v2683
    %v2700 = vsub.f32 %v2595, %v2684
    %v2701 = vsub.f32 %v2598, %v2685
    %v2702 = vsub.f32 %v2603, %v2686
    %v2703 = vsub.f32 %v2606, %v2687
    %v2704 = vsub.f32 %v2611, %v2688
    %v2705 = vsub.f32 %v2614, %v2689
    %v2706 = vsub.f32 %v2619, %v2690
    %v2707 = vsub.f32 %v2622, %v2691
    %v2708 = vsub.f32 %v2627, %v2692
    %v2709 = vsub.f32 %v2630, %v2693
    %v2710 = vsub.f32 %v2635, %v2694
    %v2711 = vsub.f32 %v2638, %v2695
    %v2712 = vsub.f32 %v2643, %v2696
    %v2713 = vsub.f32 %v2646, %v2697
    %v2714 = vmul.f32 %v2698, %v2698
    %v2715 = vmul.f32 %v2699, %v2699
    %v2716 = vmul.f32 %v2700, %v2700
    %v2717 = vmul.f32 %v2701, %v2701
    %v2718 = vmul.f32 %v2702, %v2702
    %v2719 = vmul.f32 %v2703, %v2703
    %v2720 = vmul.f32 %v2704, %v2704
    %v2721 = vmul.f32 %v2705, %v2705
    %v2722 = vmul.f32 %v2706, %v2706
    %v2723 = vmul.f32 %v2707, %v2707
    %v2724 = vmul.f32 %v2708, %v2708
    %v2725 = vmul.f32 %v2709, %v2709
    %v2726 = vmul.f32 %v2710, %v2710
    %v2727 = vmul.f32 %v2711, %v2711
    %v2728 = vmul.f32 %v2712, %v2712
    %v2729 = vmul.f32 %v2713, %v2713
    %2730 = vadd.xlane.f32.xlu0 %v2714
    %v2731 = vpop.xlane.xlu0 %2730
    %2732 = vadd.xlane.f32.xlu0 %v2715
    %v2733 = vpop.xlane.xlu0 %2732
    %2734 = vadd.xlane.f32.xlu0 %v2716
    %v2735 = vpop.xlane.xlu0 %2734
    %2736 = vadd.xlane.f32.xlu0 %v2717
    %v2737 = vpop.xlane.xlu0 %2736
    %2738 = vadd.xlane.f32.xlu0 %v2718
    %v2739 = vpop.xlane.xlu0 %2738
    %2740 = vadd.xlane.f32.xlu0 %v2719
    %v2741 = vpop.xlane.xlu0 %2740
    %2742 = vadd.xlane.f32.xlu0 %v2720
    %v2743 = vpop.xlane.xlu0 %2742
    %2744 = vadd.xlane.f32.xlu0 %v2721
    %v2745 = vpop.xlane.xlu0 %2744
    %2746 = vadd.xlane.f32.xlu0 %v2722
    %v2747 = vpop.xlane.xlu0 %2746
    %2748 = vadd.xlane.f32.xlu0 %v2723
    %v2749 = vpop.xlane.xlu0 %2748
    %2750 = vadd.xlane.f32.xlu0 %v2724
    %v2751 = vpop.xlane.xlu0 %2750
    %2752 = vadd.xlane.f32.xlu0 %v2725
    %v2753 = vpop.xlane.xlu0 %2752
    %2754 = vadd.xlane.f32.xlu0 %v2726
    %v2755 = vpop.xlane.xlu0 %2754
    %2756 = vadd.xlane.f32.xlu0 %v2727
    %v2757 = vpop.xlane.xlu0 %2756
    %2758 = vadd.xlane.f32.xlu0 %v2728
    %v2759 = vpop.xlane.xlu0 %2758
    %2760 = vadd.xlane.f32.xlu0 %v2729
    %v2761 = vpop.xlane.xlu0 %2760
    %v2762 = vmul.f32 %v2731, %v2681
    %v2763 = vmul.f32 %v2733, %v2681
    %v2764 = vmul.f32 %v2735, %v2681
    %v2765 = vmul.f32 %v2737, %v2681
    %v2766 = vmul.f32 %v2739, %v2681
    %v2767 = vmul.f32 %v2741, %v2681
    %v2768 = vmul.f32 %v2743, %v2681
    %v2769 = vmul.f32 %v2745, %v2681
    %v2770 = vmul.f32 %v2747, %v2681
    %v2771 = vmul.f32 %v2749, %v2681
    %v2772 = vmul.f32 %v2751, %v2681
    %v2773 = vmul.f32 %v2753, %v2681
    %v2774 = vmul.f32 %v2755, %v2681
    %v2775 = vmul.f32 %v2757, %v2681
    %v2776 = vmul.f32 %v2759, %v2681
    %v2777 = vmul.f32 %v2761, %v2681
    %v2778 = vadd.f32 %v2762, 1e-05
    %v2779 = vadd.f32 %v2763, 1e-05
    %v2780 = vadd.f32 %v2764, 1e-05
    %v2781 = vadd.f32 %v2765, 1e-05
    %v2782 = vadd.f32 %v2766, 1e-05
    %v2783 = vadd.f32 %v2767, 1e-05
    %v2784 = vadd.f32 %v2768, 1e-05
    %v2785 = vadd.f32 %v2769, 1e-05
    %v2786 = vadd.f32 %v2770, 1e-05
    %v2787 = vadd.f32 %v2771, 1e-05
    %v2788 = vadd.f32 %v2772, 1e-05
    %v2789 = vadd.f32 %v2773, 1e-05
    %v2790 = vadd.f32 %v2774, 1e-05
    %v2791 = vadd.f32 %v2775, 1e-05
    %v2792 = vadd.f32 %v2776, 1e-05
    %v2793 = vadd.f32 %v2777, 1e-05
    %v2794 = vrsqrt.pop %v2778
    %v2795 = vrsqrt.pop %v2779
    %v2796 = vrsqrt.pop %v2780
    %v2797 = vrsqrt.pop %v2781
    %v2798 = vrsqrt.pop %v2782
    %v2799 = vrsqrt.pop %v2783
    %v2800 = vrsqrt.pop %v2784
    %v2801 = vrsqrt.pop %v2785
    %v2802 = vrsqrt.pop %v2786
    %v2803 = vrsqrt.pop %v2787
    %v2804 = vrsqrt.pop %v2788
    %v2805 = vrsqrt.pop %v2789
    %v2806 = vrsqrt.pop %v2790
    %v2807 = vrsqrt.pop %v2791
    %v2808 = vrsqrt.pop %v2792
    %v2809 = vrsqrt.pop %v2793
    %v2810 = vmul.f32 %v2698, %v2794
    %v2811 = vmul.f32 %v2699, %v2795
    %v2812 = vmul.f32 %v2700, %v2796
    %v2813 = vmul.f32 %v2701, %v2797
    %v2814 = vmul.f32 %v2702, %v2798
    %v2815 = vmul.f32 %v2703, %v2799
    %v2816 = vmul.f32 %v2704, %v2800
    %v2817 = vmul.f32 %v2705, %v2801
    %v2818 = vmul.f32 %v2706, %v2802
    %v2819 = vmul.f32 %v2707, %v2803
    %v2820 = vmul.f32 %v2708, %v2804
    %v2821 = vmul.f32 %v2709, %v2805
    %v2822 = vmul.f32 %v2710, %v2806
    %v2823 = vmul.f32 %v2711, %v2807
    %v2824 = vmul.f32 %v2712, %v2808
    %v2825 = vmul.f32 %v2713, %v2809
    %v2826 = vld [vmem:[%s6] sm:$0x1]
    %v2828 = vlaneseq
    %v2829 = vshrl.u32 %v2828, 7
    %v2830 = vsub.s32 0, %v2829
    %v2831 = vrot.slane %v2826, %v2830
    %v2833 = vmul.f32 %v2810, %v2831
    %v2834 = vmul.f32 %v2811, %v2831
    %v2835 = vmul.f32 %v2812, %v2831
    %v2836 = vmul.f32 %v2813, %v2831
    %v2837 = vmul.f32 %v2814, %v2831
    %v2838 = vmul.f32 %v2815, %v2831
    %v2839 = vmul.f32 %v2816, %v2831
    %v2840 = vmul.f32 %v2817, %v2831
    %v2841 = vmul.f32 %v2818, %v2831
    %v2842 = vmul.f32 %v2819, %v2831
    %v2843 = vmul.f32 %v2820, %v2831
    %v2844 = vmul.f32 %v2821, %v2831
    %v2845 = vmul.f32 %v2822, %v2831
    %v2846 = vmul.f32 %v2823, %v2831
    %v2847 = vmul.f32 %v2824, %v2831
    %v2848 = vmul.f32 %v2825, %v2831
    %v2849 = vld [vmem:[%s7] sm:$0x1]
    %v2851 = vlaneseq
    %v2852 = vshrl.u32 %v2851, 7
    %v2853 = vsub.s32 0, %v2852
    %v2854 = vrot.slane %v2849, %v2853
    %v2856 = vadd.f32 %v2833, %v2854
    %v2857 = vadd.f32 %v2834, %v2854
    %v2858 = vadd.f32 %v2835, %v2854
    %v2859 = vadd.f32 %v2836, %v2854
    %v2860 = vadd.f32 %v2837, %v2854
    %v2861 = vadd.f32 %v2838, %v2854
    %v2862 = vadd.f32 %v2839, %v2854
    %v2863 = vadd.f32 %v2840, %v2854
    %v2864 = vadd.f32 %v2841, %v2854
    %v2865 = vadd.f32 %v2842, %v2854
    %v2866 = vadd.f32 %v2843, %v2854
    %v2867 = vadd.f32 %v2844, %v2854
    %v2868 = vadd.f32 %v2845, %v2854
    %v2869 = vadd.f32 %v2846, %v2854
    %v2870 = vadd.f32 %v2847, %v2854
    %v2871 = vadd.f32 %v2848, %v2854
    %2872 = vst [vmem:[#allocation8] sm:$0xff] %v2856
    %2873 = vst [vmem:[#allocation8 + $0x8] sm:$0xff] %v2857
    %2874 = vst [vmem:[#allocation8 + $0x10] sm:$0xff] %v2858
    %2875 = vst [vmem:[#allocation8 + $0x18] sm:$0xff] %v2859
    %2876 = vst [vmem:[#allocation8 + $0x20] sm:$0xff] %v2860
    %2877 = vst [vmem:[#allocation8 + $0x28] sm:$0xff] %v2861
    %2878 = vst [vmem:[#allocation8 + $0x30] sm:$0xff] %v2862
    %2879 = vst [vmem:[#allocation8 + $0x38] sm:$0xff] %v2863
    %2880 = vst [vmem:[#allocation8 + $0x40] sm:$0xff] %v2864
    %2881 = vst [vmem:[#allocation8 + $0x48] sm:$0xff] %v2865
    %2882 = vst [vmem:[#allocation8 + $0x50] sm:$0xff] %v2866
    %2883 = vst [vmem:[#allocation8 + $0x58] sm:$0xff] %v2867
    %2884 = vst [vmem:[#allocation8 + $0x60] sm:$0xff] %v2868
    %2885 = vst [vmem:[#allocation8 + $0x68] sm:$0xff] %v2869
    %2886 = vst [vmem:[#allocation8 + $0x70] sm:$0xff] %v2870
    %2887 = vst [vmem:[#allocation8 + $0x78] sm:$0xff] %v2871
    // Predicated region
    $region46: #{tpu_custom_call.1} parent=1 // pred_check
      _
    $region47: #{tpu_custom_call.1} parent=1 // pred_check_branch
      %2889 = sbr.rel (0) target = $region49
    $region48: #{tpu_custom_call.1} parent=1 // pred_region
      %s2891 = ssub.s32 2048, 2048
      %2892 = vsyncadd [#allocation4], %s2891
      %s2893 = sshll.u32 [#allocation8], 4
      %s2894 = int_to_ptr.vmem [resolvable:$true] %s2893
      %2899 = dma.vmem_to_hbm [thread:$0]  %s2894, 2048, %s8, [#allocation4], 128, 128, 8
    $region49: #{tpu_custom_call.1} parent=1 // pred_fallthru
      _
    // Predicated region
    $region50: #{tpu_custom_call.1} parent=1 // pred_check
      _
    $region51: #{tpu_custom_call.1} parent=1 // pred_check_branch
      %2901 = sbr.rel (0) target = $region53
    $region52: #{tpu_custom_call.1} parent=1 // pred_region
      %2902 = dma.done [#allocation4], 2048
    $region53: #{tpu_custom_call.1} parent=1 // pred_fallthru
      _
    %2903 = vsyncpa [#allocation3], 1
    %2904 = vsyncpa [#allocation6], 1
    %2905 = vsyncpa [#allocation4], 1

</llo_original>
